<compile_context>
chip_gen: v6e
topology: v6e:2x2x1
jax: 0.10.0
libtpu: 0.0.40
codegen_flags: <defaults>
</compile_context>

<pallas_src>
import functools

import jax
import jax.numpy as jnp
from jax.experimental import pallas as pl
from jax.experimental.pallas import tpu as pltpu


def _conv_block_kernel(x_ref, w1_ref, b1_ref, w2_ref, b2_ref, cmask_ref,
                       out_ref, x_ext_ref, a1_ext_ref, *, W, M):
    """One grid step: a block of images, both conv+BN+ReLU stages fused.

    Layout: channels on sublanes, flattened H*W pixels on lanes (row stride W).
    A 3x3 tap (dy, dx) is the flat shift dy*W + dx; row out-of-bounds reads
    land in the zeroed margins of the extended scratch, column out-of-bounds
    contributions are killed by the dx = +/-1 masks.
    """
    Nb = x_ref.shape[0]               # images in this grid step
    Q = x_ref.shape[-1]               # flattened H*W pixels (lane axis)
    C_in = x_ref.shape[1]
    C_mid = b1_ref.shape[0]

    taps = [(dy, dx) for dy in (-1, 0, 1) for dx in (-1, 0, 1)]

    # column-validity masks, (1, Q):  row 0 -> dx = -1 taps, row 1 -> dx = +1
    mask_l = cmask_ref[0:1, :]
    mask_r = cmask_ref[1:2, :]

    # Zero only the margin lanes (interior is fully rewritten below).  Done
    # every step — not under program_id()==0 — so megacore sharding of the
    # "parallel" grid axis (v7x) cannot leave a core with unzeroed margins.
    x_ext_ref[:, :M] = jnp.zeros((C_in, M), jnp.float32)
    x_ext_ref[:, M + Q:] = jnp.zeros((C_in, M), jnp.float32)
    a1_ext_ref[:, :M] = jnp.zeros((C_mid, M), jnp.float32)
    a1_ext_ref[:, M + Q:] = jnp.zeros((C_mid, M), jnp.float32)

    def conv3x3(ext_ref, w_ref, b_ref, c_in):
        # 9 small MXU matmuls (one per tap), accumulated in f32 registers.
        acc = None
        for t, (dy, dx) in enumerate(taps):
            s = M + dy * W + dx                       # static lane offset
            xs = ext_ref[:, s:s + Q]                  # (c_in, Q) shifted view
            if dx == -1:
                xs = xs * mask_l
            elif dx == 1:
                xs = xs * mask_r
            w_t = w_ref[:, t * c_in:(t + 1) * c_in]   # (c_next, c_in)
            term = jnp.dot(w_t, xs, preferred_element_type=jnp.float32)
            acc = term if acc is None else acc + term
        return jnp.maximum(acc + b_ref[...], 0.0)     # folded-BN bias + ReLU

    for nb in range(Nb):                              # static block-batch loop
        # ---- conv1 (3x3) + BN1 (folded) + ReLU -------------------------------
        x_ext_ref[:, M:M + Q] = x_ref[nb].astype(jnp.float32)   # lane-aligned
        a1 = conv3x3(x_ext_ref, w1_ref, b1_ref, C_in)           # (C_mid, Q)

        # ---- conv2 (3x3) + BN2 (folded) + ReLU -------------------------------
        a1_ext_ref[:, M:M + Q] = a1                             # lane-aligned
        a2 = conv3x3(a1_ext_ref, w2_ref, b2_ref, C_mid)         # (C_out, Q)

        out_ref[nb] = a2.astype(out_ref.dtype)        # Q is lane-dense (256)


def fold_bn_into_conv3x3(w, b, gamma, beta, mean, var, eps=1e-5):
    """Fold inference-mode BatchNorm into a 3x3 conv.

    w: (C_out, C_in, 3, 3), b: (C_out,).
    Returns a packed weight matrix (C_out, 9*C_in) with column index
    t*C_in + ci, t = (dy+1)*3 + (dx+1), and bias (C_out, 1).
    """
    scale = gamma / jnp.sqrt(var + eps)                     # (C_out,)
    w_eff = w * scale[:, None, None, None]                  # (C_out, C_in, 3, 3)
    b_eff = (b - mean) * scale + beta                       # (C_out,)
    c_out, c_in = w.shape[0], w.shape[1]
    w_mat = jnp.transpose(w_eff, (0, 2, 3, 1)).reshape(c_out, 9 * c_in)
    return w_mat, b_eff[:, None]


def conv_block(x_nchw, params, *, eps=1e-5, max_images_per_step=8):
    """Forward pass of conv_block.  x: (N, C_in, H, W) -> (N, C_out, H, W)."""
    N, C_in, H, W = x_nchw.shape
    w1, b1 = fold_bn_into_conv3x3(*params["conv1"], eps=eps)
    w2, b2 = fold_bn_into_conv3x3(*params["conv2"], eps=eps)
    C_mid = w1.shape[0]
    C_out = w2.shape[0]
    assert w1.shape[1] == 9 * C_in and w2.shape[1] == 9 * C_mid

    Q = H * W                                    # pixels on lanes (256 here)
    M = 128 * ((W + 1 + 127) // 128)             # lane-aligned flat margin >= W+1

    # Free reshape only — no pad / crop passes over HBM.
    x_flat = x_nchw.reshape(N, C_in, Q)

    # Column-validity masks for dx=-1 / dx=+1 taps (tiny constant input; kept
    # in the wrapper instead of in-kernel iota+mod for bulletproof lowering).
    col = jnp.arange(Q, dtype=jnp.int32) % W
    cmask = jnp.stack([col >= 1, col <= W - 2]).astype(jnp.float32)   # (2, Q)

    # Images per grid step: amortise the ~0.35us per-step overhead for large N
    # but keep the parallel grid length >= 2 so both v7x TensorCores get work.
    cap = max(1, min(max_images_per_step, N // 2))
    Nb = max(d for d in range(1, cap + 1) if N % d == 0)
    grid = (N // Nb,)

    kernel = functools.partial(_conv_block_kernel, W=W, M=M)

    def full2d(shape):
        return pl.BlockSpec(shape, lambda n: (0, 0))

    out_flat = pl.pallas_call(
        kernel,
        out_shape=jax.ShapeDtypeStruct((N, C_out, Q), x_nchw.dtype),
        grid_spec=pltpu.PrefetchScalarGridSpec(
            num_scalar_prefetch=0,
            grid=grid,
            in_specs=[
                pl.BlockSpec((Nb, C_in, Q), lambda n: (n, 0, 0)),   # x (flat)
                full2d((C_mid, 9 * C_in)),                          # w1 (folded, packed)
                full2d((C_mid, 1)),                                 # b1
                full2d((C_out, 9 * C_mid)),                         # w2 (folded, packed)
                full2d((C_out, 1)),                                 # b2
                full2d((2, Q)),                                     # column masks
            ],
            out_specs=pl.BlockSpec((Nb, C_out, Q), lambda n: (n, 0, 0)),
            scratch_shapes=[
                pltpu.VMEM((C_in, Q + 2 * M), jnp.float32),   # x, margin-extended
                pltpu.VMEM((C_mid, Q + 2 * M), jnp.float32),  # a1, margin-extended
            ],
        ),
        compiler_params=pltpu.CompilerParams(
            dimension_semantics=("parallel",)),               # shard images across TCs
    )(x_flat, w1, b1, w2, b2, cmask)

    return out_flat.reshape(N, C_out, H, W)                  # free reshape


def conv_block_ref(x, params, *, eps=1e-5):
    """Pure-JAX reference (same inference-mode BN semantics)."""
    def layer(y, w, b, gamma, beta, mean, var):
        y = jax.lax.conv_general_dilated(
            y, w, window_strides=(1, 1), padding=((1, 1), (1, 1)),
            dimension_numbers=("NCHW", "OIHW", "NCHW"),
            precision=jax.lax.Precision.HIGHEST)
        y = y + b[None, :, None, None]
        y = (y - mean[None, :, None, None]) * (
            gamma[None, :, None, None] / jnp.sqrt(var[None, :, None, None] + eps))
        y = y + beta[None, :, None, None]
        return jnp.maximum(y, 0.0)

    y = layer(x, *params["conv1"])
    y = layer(y, *params["conv2"])
    return y


def make_params(key, ch_in, ch_out):
    """Deterministic synthetic parameters.
    Each entry: (conv_weight (C_out, C_in, 3, 3), conv_bias, bn_gamma, bn_beta, bn_mean, bn_var)."""
    ks = jax.random.split(key, 6)

    def conv_bn(kw, kb, kbn, c_in, c_out):
        w = jax.random.normal(kw, (c_out, c_in, 3, 3), jnp.float32) * 0.2
        b = jax.random.normal(kb, (c_out,), jnp.float32) * 0.1
        k1, k2, k3, k4 = jax.random.split(kbn, 4)
        gamma = 1.0 + 0.1 * jax.random.normal(k1, (c_out,), jnp.float32)
        beta = 0.1 * jax.random.normal(k2, (c_out,), jnp.float32)
        mean = 0.1 * jax.random.normal(k3, (c_out,), jnp.float32)
        var = 0.9 + 0.2 * jax.random.uniform(k4, (c_out,), jnp.float32)
        return (w, b, gamma, beta, mean, var)

    return {
        "conv1": conv_bn(ks[0], ks[1], ks[2], ch_in, ch_out),
        "conv2": conv_bn(ks[3], ks[4], ks[5], ch_out, ch_out),
    }


if __name__ == "__main__":
    key = jax.random.PRNGKey(0)
    k_x, k_p = jax.random.split(key)

    N, C_in, H, W = 2, 4, 16, 16
    C_out = 8

    x = jax.random.normal(k_x, (N, C_in, H, W), jnp.float32)
    params = make_params(k_p, C_in, C_out)

    out = conv_block(x, params)
    out = jax.block_until_ready(out)

    ref = conv_block_ref(x, params)
    assert out.shape == (N, C_out, H, W)
    # small tolerance slack for MXU f32 matmul rounding vs HIGHEST-precision ref
    assert jnp.allclose(out, ref, atol=1e-3, rtol=1e-3), "mismatch vs reference"

    print("KERNEL_OK")
</pallas_src>

<mosaic_0001>
module attributes {stable_mosaic.version = 11 : i64} {
  func.func @_conv_block_kernel(%arg0: i32, %arg1: memref<1x4x256xf32, #tpu.memory_space<vmem>>, %arg2: memref<8x36xf32, #tpu.memory_space<vmem>>, %arg3: memref<8x1xf32, #tpu.memory_space<vmem>>, %arg4: memref<8x72xf32, #tpu.memory_space<vmem>>, %arg5: memref<8x1xf32, #tpu.memory_space<vmem>>, %arg6: memref<2x256xf32, #tpu.memory_space<vmem>>, %arg7: memref<1x8x256xf32, #tpu.memory_space<vmem>>, %arg8: memref<4x512xf32, #tpu.memory_space<vmem>>, %arg9: memref<8x512xf32, #tpu.memory_space<vmem>>) attributes {dimension_semantics = [#tpu.dimension_semantics<parallel>], iteration_bounds = array<i64: 2>, scalar_prefetch = 0 : i64, scratch_operands = 2 : i64, tpu.core_type = #tpu.core_type<tc>, window_params = [{transform_indices = @transform_0, window_bounds = array<i64: 1, 4, 256>}, {pipeline_mode = #tpu.pipeline_mode<synchronous>, transform_indices = @transform_1, window_bounds = array<i64: 8, 36>}, {pipeline_mode = #tpu.pipeline_mode<synchronous>, transform_indices = @transform_2, window_bounds = array<i64: 8, 1>}, {pipeline_mode = #tpu.pipeline_mode<synchronous>, transform_indices = @transform_3, window_bounds = array<i64: 8, 72>}, {pipeline_mode = #tpu.pipeline_mode<synchronous>, transform_indices = @transform_4, window_bounds = array<i64: 8, 1>}, {pipeline_mode = #tpu.pipeline_mode<synchronous>, transform_indices = @transform_5, window_bounds = array<i64: 2, 256>}, {transform_indices = @transform_6, window_bounds = array<i64: 1, 8, 256>}]} {
    %c0 = arith.constant 0 : index
    %c0_0 = arith.constant 0 : index
    %0 = vector.load %arg6[%c0, %c0_0] : memref<2x256xf32, #tpu.memory_space<vmem>>, vector<1x256xf32>
    %c1 = arith.constant 1 : index
    %c0_1 = arith.constant 0 : index
    %1 = vector.load %arg6[%c1, %c0_1] : memref<2x256xf32, #tpu.memory_space<vmem>>, vector<1x256xf32>
    %cst = arith.constant 0.000000e+00 : f32
    %2 = vector.broadcast %cst : f32 to vector<4x128xf32>
    %c0_2 = arith.constant 0 : index
    %c0_3 = arith.constant 0 : index
    %3 = vector.load %arg8[%c0_2, %c0_3] : memref<4x512xf32, #tpu.memory_space<vmem>>, vector<4x128xf32>
    tpu.vector_store %arg8[%c0_2, %c0_3], %2 {strides = array<i32>} : memref<4x512xf32, #tpu.memory_space<vmem>>, vector<4x128xf32>,
    %cst_4 = arith.constant 0.000000e+00 : f32
    %4 = vector.broadcast %cst_4 : f32 to vector<4x128xf32>
    %c0_5 = arith.constant 0 : index
    %c384 = arith.constant 384 : index
    %5 = vector.load %arg8[%c0_5, %c384] : memref<4x512xf32, #tpu.memory_space<vmem>>, vector<4x128xf32>
    tpu.vector_store %arg8[%c0_5, %c384], %4 {strides = array<i32>} : memref<4x512xf32, #tpu.memory_space<vmem>>, vector<4x128xf32>,
    %cst_6 = arith.constant 0.000000e+00 : f32
    %6 = vector.broadcast %cst_6 : f32 to vector<8x128xf32>
    %c0_7 = arith.constant 0 : index
    %c0_8 = arith.constant 0 : index
    %7 = vector.load %arg9[%c0_7, %c0_8] : memref<8x512xf32, #tpu.memory_space<vmem>>, vector<8x128xf32>
    tpu.vector_store %arg9[%c0_7, %c0_8], %6 {strides = array<i32>} : memref<8x512xf32, #tpu.memory_space<vmem>>, vector<8x128xf32>,
    %cst_9 = arith.constant 0.000000e+00 : f32
    %8 = vector.broadcast %cst_9 : f32 to vector<8x128xf32>
    %c0_10 = arith.constant 0 : index
    %c384_11 = arith.constant 384 : index
    %9 = vector.load %arg9[%c0_10, %c384_11] : memref<8x512xf32, #tpu.memory_space<vmem>>, vector<8x128xf32>
    tpu.vector_store %arg9[%c0_10, %c384_11], %8 {strides = array<i32>} : memref<8x512xf32, #tpu.memory_space<vmem>>, vector<8x128xf32>,
    %c0_12 = arith.constant 0 : index
    %c0_13 = arith.constant 0 : index
    %c0_14 = arith.constant 0 : index
    %10 = vector.load %arg1[%c0_12, %c0_13, %c0_14] : memref<1x4x256xf32, #tpu.memory_space<vmem>>, vector<1x4x256xf32>
    %11 = vector.shape_cast %10 : vector<1x4x256xf32> to vector<4x256xf32>
    %c0_15 = arith.constant 0 : index
    %c128 = arith.constant 128 : index
    %12 = vector.load %arg8[%c0_15, %c128] : memref<4x512xf32, #tpu.memory_space<vmem>>, vector<4x256xf32>
    tpu.vector_store %arg8[%c0_15, %c128], %11 {strides = array<i32>} : memref<4x512xf32, #tpu.memory_space<vmem>>, vector<4x256xf32>,
    %c0_16 = arith.constant 0 : index
    %c111 = arith.constant 111 : index
    %13 = vector.load %arg8[%c0_16, %c111] : memref<4x512xf32, #tpu.memory_space<vmem>>, vector<4x256xf32>
    %14 = vector.broadcast %0 : vector<1x256xf32> to vector<4x256xf32>
    %15 = arith.mulf %13, %14 : vector<4x256xf32>
    %c0_17 = arith.constant 0 : index
    %c0_18 = arith.constant 0 : index
    %16 = vector.load %arg2[%c0_17, %c0_18] : memref<8x36xf32, #tpu.memory_space<vmem>>, vector<8x4xf32>
    %cst_19 = arith.constant dense<0.000000e+00> : vector<8x256xf32>
    %17 = tpu.matmul %16, %15, %cst_19 {dimension_numbers = #tpu.dot_dimension_numbers<[1], [0], [0], [1], [0, 0, 1, 1], [], []>} : vector<8x4xf32>, vector<4x256xf32>, vector<8x256xf32> -> vector<8x256xf32>
    %c0_20 = arith.constant 0 : index
    %c112 = arith.constant 112 : index
    %18 = vector.load %arg8[%c0_20, %c112] : memref<4x512xf32, #tpu.memory_space<vmem>>, vector<4x256xf32>
    %c0_21 = arith.constant 0 : index
    %c4 = arith.constant 4 : index
    %19 = vector.load %arg2[%c0_21, %c4] : memref<8x36xf32, #tpu.memory_space<vmem>>, vector<8x4xf32>
    %cst_22 = arith.constant dense<0.000000e+00> : vector<8x256xf32>
    %20 = tpu.matmul %19, %18, %cst_22 {dimension_numbers = #tpu.dot_dimension_numbers<[1], [0], [0], [1], [0, 0, 1, 1], [], []>} : vector<8x4xf32>, vector<4x256xf32>, vector<8x256xf32> -> vector<8x256xf32>
    %21 = arith.addf %17, %20 : vector<8x256xf32>
    %c0_23 = arith.constant 0 : index
    %c113 = arith.constant 113 : index
    %22 = vector.load %arg8[%c0_23, %c113] : memref<4x512xf32, #tpu.memory_space<vmem>>, vector<4x256xf32>
    %23 = vector.broadcast %1 : vector<1x256xf32> to vector<4x256xf32>
    %24 = arith.mulf %22, %23 : vector<4x256xf32>
    %c0_24 = arith.constant 0 : index
    %c8 = arith.constant 8 : index
    %25 = vector.load %arg2[%c0_24, %c8] : memref<8x36xf32, #tpu.memory_space<vmem>>, vector<8x4xf32>
    %cst_25 = arith.constant dense<0.000000e+00> : vector<8x256xf32>
    %26 = tpu.matmul %25, %24, %cst_25 {dimension_numbers = #tpu.dot_dimension_numbers<[1], [0], [0], [1], [0, 0, 1, 1], [], []>} : vector<8x4xf32>, vector<4x256xf32>, vector<8x256xf32> -> vector<8x256xf32>
    %27 = arith.addf %21, %26 : vector<8x256xf32>
    %c0_26 = arith.constant 0 : index
    %c127 = arith.constant 127 : index
    %28 = vector.load %arg8[%c0_26, %c127] : memref<4x512xf32, #tpu.memory_space<vmem>>, vector<4x256xf32>
    %29 = vector.broadcast %0 : vector<1x256xf32> to vector<4x256xf32>
    %30 = arith.mulf %28, %29 : vector<4x256xf32>
    %c0_27 = arith.constant 0 : index
    %c12 = arith.constant 12 : index
    %31 = vector.load %arg2[%c0_27, %c12] : memref<8x36xf32, #tpu.memory_space<vmem>>, vector<8x4xf32>
    %cst_28 = arith.constant dense<0.000000e+00> : vector<8x256xf32>
    %32 = tpu.matmul %31, %30, %cst_28 {dimension_numbers = #tpu.dot_dimension_numbers<[1], [0], [0], [1], [0, 0, 1, 1], [], []>} : vector<8x4xf32>, vector<4x256xf32>, vector<8x256xf32> -> vector<8x256xf32>
    %33 = arith.addf %27, %32 : vector<8x256xf32>
    %c0_29 = arith.constant 0 : index
    %c128_30 = arith.constant 128 : index
    %34 = vector.load %arg8[%c0_29, %c128_30] : memref<4x512xf32, #tpu.memory_space<vmem>>, vector<4x256xf32>
    %c0_31 = arith.constant 0 : index
    %c16 = arith.constant 16 : index
    %35 = vector.load %arg2[%c0_31, %c16] : memref<8x36xf32, #tpu.memory_space<vmem>>, vector<8x4xf32>
    %cst_32 = arith.constant dense<0.000000e+00> : vector<8x256xf32>
    %36 = tpu.matmul %35, %34, %cst_32 {dimension_numbers = #tpu.dot_dimension_numbers<[1], [0], [0], [1], [0, 0, 1, 1], [], []>} : vector<8x4xf32>, vector<4x256xf32>, vector<8x256xf32> -> vector<8x256xf32>
    %37 = arith.addf %33, %36 : vector<8x256xf32>
    %c0_33 = arith.constant 0 : index
    %c129 = arith.constant 129 : index
    %38 = vector.load %arg8[%c0_33, %c129] : memref<4x512xf32, #tpu.memory_space<vmem>>, vector<4x256xf32>
    %39 = vector.broadcast %1 : vector<1x256xf32> to vector<4x256xf32>
    %40 = arith.mulf %38, %39 : vector<4x256xf32>
    %c0_34 = arith.constant 0 : index
    %c20 = arith.constant 20 : index
    %41 = vector.load %arg2[%c0_34, %c20] : memref<8x36xf32, #tpu.memory_space<vmem>>, vector<8x4xf32>
    %cst_35 = arith.constant dense<0.000000e+00> : vector<8x256xf32>
    %42 = tpu.matmul %41, %40, %cst_35 {dimension_numbers = #tpu.dot_dimension_numbers<[1], [0], [0], [1], [0, 0, 1, 1], [], []>} : vector<8x4xf32>, vector<4x256xf32>, vector<8x256xf32> -> vector<8x256xf32>
    %43 = arith.addf %37, %42 : vector<8x256xf32>
    %c0_36 = arith.constant 0 : index
    %c143 = arith.constant 143 : index
    %44 = vector.load %arg8[%c0_36, %c143] : memref<4x512xf32, #tpu.memory_space<vmem>>, vector<4x256xf32>
    %45 = vector.broadcast %0 : vector<1x256xf32> to vector<4x256xf32>
    %46 = arith.mulf %44, %45 : vector<4x256xf32>
    %c0_37 = arith.constant 0 : index
    %c24 = arith.constant 24 : index
    %47 = vector.load %arg2[%c0_37, %c24] : memref<8x36xf32, #tpu.memory_space<vmem>>, vector<8x4xf32>
    %cst_38 = arith.constant dense<0.000000e+00> : vector<8x256xf32>
    %48 = tpu.matmul %47, %46, %cst_38 {dimension_numbers = #tpu.dot_dimension_numbers<[1], [0], [0], [1], [0, 0, 1, 1], [], []>} : vector<8x4xf32>, vector<4x256xf32>, vector<8x256xf32> -> vector<8x256xf32>
    %49 = arith.addf %43, %48 : vector<8x256xf32>
    %c0_39 = arith.constant 0 : index
    %c144 = arith.constant 144 : index
    %50 = vector.load %arg8[%c0_39, %c144] : memref<4x512xf32, #tpu.memory_space<vmem>>, vector<4x256xf32>
    %c0_40 = arith.constant 0 : index
    %c28 = arith.constant 28 : index
    %51 = vector.load %arg2[%c0_40, %c28] : memref<8x36xf32, #tpu.memory_space<vmem>>, vector<8x4xf32>
    %cst_41 = arith.constant dense<0.000000e+00> : vector<8x256xf32>
    %52 = tpu.matmul %51, %50, %cst_41 {dimension_numbers = #tpu.dot_dimension_numbers<[1], [0], [0], [1], [0, 0, 1, 1], [], []>} : vector<8x4xf32>, vector<4x256xf32>, vector<8x256xf32> -> vector<8x256xf32>
    %53 = arith.addf %49, %52 : vector<8x256xf32>
    %c0_42 = arith.constant 0 : index
    %c145 = arith.constant 145 : index
    %54 = vector.load %arg8[%c0_42, %c145] : memref<4x512xf32, #tpu.memory_space<vmem>>, vector<4x256xf32>
    %55 = vector.broadcast %1 : vector<1x256xf32> to vector<4x256xf32>
    %56 = arith.mulf %54, %55 : vector<4x256xf32>
    %c0_43 = arith.constant 0 : index
    %c32 = arith.constant 32 : index
    %57 = vector.load %arg2[%c0_43, %c32] : memref<8x36xf32, #tpu.memory_space<vmem>>, vector<8x4xf32>
    %cst_44 = arith.constant dense<0.000000e+00> : vector<8x256xf32>
    %58 = tpu.matmul %57, %56, %cst_44 {dimension_numbers = #tpu.dot_dimension_numbers<[1], [0], [0], [1], [0, 0, 1, 1], [], []>} : vector<8x4xf32>, vector<4x256xf32>, vector<8x256xf32> -> vector<8x256xf32>
    %59 = arith.addf %53, %58 : vector<8x256xf32>
    %c0_45 = arith.constant 0 : index
    %c0_46 = arith.constant 0 : index
    %60 = vector.load %arg3[%c0_45, %c0_46] : memref<8x1xf32, #tpu.memory_space<vmem>>, vector<8x1xf32>
    %61 = vector.broadcast %60 : vector<8x1xf32> to vector<8x256xf32>
    %62 = arith.addf %59, %61 : vector<8x256xf32>
    %cst_47 = arith.constant 0.000000e+00 : f32
    %63 = vector.broadcast %cst_47 : f32 to vector<8x256xf32>
    %64 = arith.maximumf %62, %63 : vector<8x256xf32>
    %c0_48 = arith.constant 0 : index
    %c128_49 = arith.constant 128 : index
    %65 = vector.load %arg9[%c0_48, %c128_49] : memref<8x512xf32, #tpu.memory_space<vmem>>, vector<8x256xf32>
    tpu.vector_store %arg9[%c0_48, %c128_49], %64 {strides = array<i32>} : memref<8x512xf32, #tpu.memory_space<vmem>>, vector<8x256xf32>,
    %c0_50 = arith.constant 0 : index
    %c111_51 = arith.constant 111 : index
    %66 = vector.load %arg9[%c0_50, %c111_51] : memref<8x512xf32, #tpu.memory_space<vmem>>, vector<8x256xf32>
    %67 = vector.broadcast %0 : vector<1x256xf32> to vector<8x256xf32>
    %68 = arith.mulf %66, %67 : vector<8x256xf32>
    %c0_52 = arith.constant 0 : index
    %c0_53 = arith.constant 0 : index
    %69 = vector.load %arg4[%c0_52, %c0_53] : memref<8x72xf32, #tpu.memory_space<vmem>>, vector<8x8xf32>
    %cst_54 = arith.constant dense<0.000000e+00> : vector<8x256xf32>
    %70 = tpu.matmul %69, %68, %cst_54 {dimension_numbers = #tpu.dot_dimension_numbers<[1], [0], [0], [1], [0, 0, 1, 1], [], []>} : vector<8x8xf32>, vector<8x256xf32>, vector<8x256xf32> -> vector<8x256xf32>
    %c0_55 = arith.constant 0 : index
    %c112_56 = arith.constant 112 : index
    %71 = vector.load %arg9[%c0_55, %c112_56] : memref<8x512xf32, #tpu.memory_space<vmem>>, vector<8x256xf32>
    %c0_57 = arith.constant 0 : index
    %c8_58 = arith.constant 8 : index
    %72 = vector.load %arg4[%c0_57, %c8_58] : memref<8x72xf32, #tpu.memory_space<vmem>>, vector<8x8xf32>
    %cst_59 = arith.constant dense<0.000000e+00> : vector<8x256xf32>
    %73 = tpu.matmul %72, %71, %cst_59 {dimension_numbers = #tpu.dot_dimension_numbers<[1], [0], [0], [1], [0, 0, 1, 1], [], []>} : vector<8x8xf32>, vector<8x256xf32>, vector<8x256xf32> -> vector<8x256xf32>
    %74 = arith.addf %70, %73 : vector<8x256xf32>
    %c0_60 = arith.constant 0 : index
    %c113_61 = arith.constant 113 : index
    %75 = vector.load %arg9[%c0_60, %c113_61] : memref<8x512xf32, #tpu.memory_space<vmem>>, vector<8x256xf32>
    %76 = vector.broadcast %1 : vector<1x256xf32> to vector<8x256xf32>
    %77 = arith.mulf %75, %76 : vector<8x256xf32>
    %c0_62 = arith.constant 0 : index
    %c16_63 = arith.constant 16 : index
    %78 = vector.load %arg4[%c0_62, %c16_63] : memref<8x72xf32, #tpu.memory_space<vmem>>, vector<8x8xf32>
    %cst_64 = arith.constant dense<0.000000e+00> : vector<8x256xf32>
    %79 = tpu.matmul %78, %77, %cst_64 {dimension_numbers = #tpu.dot_dimension_numbers<[1], [0], [0], [1], [0, 0, 1, 1], [], []>} : vector<8x8xf32>, vector<8x256xf32>, vector<8x256xf32> -> vector<8x256xf32>
    %80 = arith.addf %74, %79 : vector<8x256xf32>
    %c0_65 = arith.constant 0 : index
    %c127_66 = arith.constant 127 : index
    %81 = vector.load %arg9[%c0_65, %c127_66] : memref<8x512xf32, #tpu.memory_space<vmem>>, vector<8x256xf32>
    %82 = vector.broadcast %0 : vector<1x256xf32> to vector<8x256xf32>
    %83 = arith.mulf %81, %82 : vector<8x256xf32>
    %c0_67 = arith.constant 0 : index
    %c24_68 = arith.constant 24 : index
    %84 = vector.load %arg4[%c0_67, %c24_68] : memref<8x72xf32, #tpu.memory_space<vmem>>, vector<8x8xf32>
    %cst_69 = arith.constant dense<0.000000e+00> : vector<8x256xf32>
    %85 = tpu.matmul %84, %83, %cst_69 {dimension_numbers = #tpu.dot_dimension_numbers<[1], [0], [0], [1], [0, 0, 1, 1], [], []>} : vector<8x8xf32>, vector<8x256xf32>, vector<8x256xf32> -> vector<8x256xf32>
    %86 = arith.addf %80, %85 : vector<8x256xf32>
    %c0_70 = arith.constant 0 : index
    %c128_71 = arith.constant 128 : index
    %87 = vector.load %arg9[%c0_70, %c128_71] : memref<8x512xf32, #tpu.memory_space<vmem>>, vector<8x256xf32>
    %c0_72 = arith.constant 0 : index
    %c32_73 = arith.constant 32 : index
    %88 = vector.load %arg4[%c0_72, %c32_73] : memref<8x72xf32, #tpu.memory_space<vmem>>, vector<8x8xf32>
    %cst_74 = arith.constant dense<0.000000e+00> : vector<8x256xf32>
    %89 = tpu.matmul %88, %87, %cst_74 {dimension_numbers = #tpu.dot_dimension_numbers<[1], [0], [0], [1], [0, 0, 1, 1], [], []>} : vector<8x8xf32>, vector<8x256xf32>, vector<8x256xf32> -> vector<8x256xf32>
    %90 = arith.addf %86, %89 : vector<8x256xf32>
    %c0_75 = arith.constant 0 : index
    %c129_76 = arith.constant 129 : index
    %91 = vector.load %arg9[%c0_75, %c129_76] : memref<8x512xf32, #tpu.memory_space<vmem>>, vector<8x256xf32>
    %92 = vector.broadcast %1 : vector<1x256xf32> to vector<8x256xf32>
    %93 = arith.mulf %91, %92 : vector<8x256xf32>
    %c0_77 = arith.constant 0 : index
    %c40 = arith.constant 40 : index
    %94 = vector.load %arg4[%c0_77, %c40] : memref<8x72xf32, #tpu.memory_space<vmem>>, vector<8x8xf32>
    %cst_78 = arith.constant dense<0.000000e+00> : vector<8x256xf32>
    %95 = tpu.matmul %94, %93, %cst_78 {dimension_numbers = #tpu.dot_dimension_numbers<[1], [0], [0], [1], [0, 0, 1, 1], [], []>} : vector<8x8xf32>, vector<8x256xf32>, vector<8x256xf32> -> vector<8x256xf32>
    %96 = arith.addf %90, %95 : vector<8x256xf32>
    %c0_79 = arith.constant 0 : index
    %c143_80 = arith.constant 143 : index
    %97 = vector.load %arg9[%c0_79, %c143_80] : memref<8x512xf32, #tpu.memory_space<vmem>>, vector<8x256xf32>
    %98 = vector.broadcast %0 : vector<1x256xf32> to vector<8x256xf32>
    %99 = arith.mulf %97, %98 : vector<8x256xf32>
    %c0_81 = arith.constant 0 : index
    %c48 = arith.constant 48 : index
    %100 = vector.load %arg4[%c0_81, %c48] : memref<8x72xf32, #tpu.memory_space<vmem>>, vector<8x8xf32>
    %cst_82 = arith.constant dense<0.000000e+00> : vector<8x256xf32>
    %101 = tpu.matmul %100, %99, %cst_82 {dimension_numbers = #tpu.dot_dimension_numbers<[1], [0], [0], [1], [0, 0, 1, 1], [], []>} : vector<8x8xf32>, vector<8x256xf32>, vector<8x256xf32> -> vector<8x256xf32>
    %102 = arith.addf %96, %101 : vector<8x256xf32>
    %c0_83 = arith.constant 0 : index
    %c144_84 = arith.constant 144 : index
    %103 = vector.load %arg9[%c0_83, %c144_84] : memref<8x512xf32, #tpu.memory_space<vmem>>, vector<8x256xf32>
    %c0_85 = arith.constant 0 : index
    %c56 = arith.constant 56 : index
    %104 = vector.load %arg4[%c0_85, %c56] : memref<8x72xf32, #tpu.memory_space<vmem>>, vector<8x8xf32>
    %cst_86 = arith.constant dense<0.000000e+00> : vector<8x256xf32>
    %105 = tpu.matmul %104, %103, %cst_86 {dimension_numbers = #tpu.dot_dimension_numbers<[1], [0], [0], [1], [0, 0, 1, 1], [], []>} : vector<8x8xf32>, vector<8x256xf32>, vector<8x256xf32> -> vector<8x256xf32>
    %106 = arith.addf %102, %105 : vector<8x256xf32>
    %c0_87 = arith.constant 0 : index
    %c145_88 = arith.constant 145 : index
    %107 = vector.load %arg9[%c0_87, %c145_88] : memref<8x512xf32, #tpu.memory_space<vmem>>, vector<8x256xf32>
    %108 = vector.broadcast %1 : vector<1x256xf32> to vector<8x256xf32>
    %109 = arith.mulf %107, %108 : vector<8x256xf32>
    %c0_89 = arith.constant 0 : index
    %c64 = arith.constant 64 : index
    %110 = vector.load %arg4[%c0_89, %c64] : memref<8x72xf32, #tpu.memory_space<vmem>>, vector<8x8xf32>
    %cst_90 = arith.constant dense<0.000000e+00> : vector<8x256xf32>
    %111 = tpu.matmul %110, %109, %cst_90 {dimension_numbers = #tpu.dot_dimension_numbers<[1], [0], [0], [1], [0, 0, 1, 1], [], []>} : vector<8x8xf32>, vector<8x256xf32>, vector<8x256xf32> -> vector<8x256xf32>
    %112 = arith.addf %106, %111 : vector<8x256xf32>
    %c0_91 = arith.constant 0 : index
    %c0_92 = arith.constant 0 : index
    %113 = vector.load %arg5[%c0_91, %c0_92] : memref<8x1xf32, #tpu.memory_space<vmem>>, vector<8x1xf32>
    %114 = vector.broadcast %113 : vector<8x1xf32> to vector<8x256xf32>
    %115 = arith.addf %112, %114 : vector<8x256xf32>
    %cst_93 = arith.constant 0.000000e+00 : f32
    %116 = vector.broadcast %cst_93 : f32 to vector<8x256xf32>
    %117 = arith.maximumf %115, %116 : vector<8x256xf32>
    %c0_94 = arith.constant 0 : index
    %c0_95 = arith.constant 0 : index
    %c0_96 = arith.constant 0 : index
    %118 = vector.load %arg7[%c0_94, %c0_95, %c0_96] : memref<1x8x256xf32, #tpu.memory_space<vmem>>, vector<1x8x256xf32>
    %119 = vector.shape_cast %118 : vector<1x8x256xf32> to vector<8x256xf32>
    %120 = vector.shape_cast %117 : vector<8x256xf32> to vector<1x8x256xf32>
    tpu.vector_store %arg7[%c0_94, %c0_95, %c0_96], %120 {strides = array<i32>} : memref<1x8x256xf32, #tpu.memory_space<vmem>>, vector<1x8x256xf32>,
    return
  }
  func.func @transform_0(%arg0: i32) -> (i32, i32, i32) {
    %c0_i32 = arith.constant 0 : i32
    %c0_i32_0 = arith.constant 0 : i32
    %c0_i32_1 = arith.constant 0 : i32
    return %arg0, %c0_i32, %c0_i32_0 : i32, i32, i32
  }
  func.func @transform_1(%arg0: i32) -> (i32, i32) {
    %c0_i32 = arith.constant 0 : i32
    %c0_i32_0 = arith.constant 0 : i32
    %c0_i32_1 = arith.constant 0 : i32
    return %c0_i32, %c0_i32_0 : i32, i32
  }
  func.func @transform_2(%arg0: i32) -> (i32, i32) {
    %c0_i32 = arith.constant 0 : i32
    %c0_i32_0 = arith.constant 0 : i32
    %c0_i32_1 = arith.constant 0 : i32
    return %c0_i32, %c0_i32_0 : i32, i32
  }
  func.func @transform_3(%arg0: i32) -> (i32, i32) {
    %c0_i32 = arith.constant 0 : i32
    %c0_i32_0 = arith.constant 0 : i32
    %c0_i32_1 = arith.constant 0 : i32
    return %c0_i32, %c0_i32_0 : i32, i32
  }
  func.func @transform_4(%arg0: i32) -> (i32, i32) {
    %c0_i32 = arith.constant 0 : i32
    %c0_i32_0 = arith.constant 0 : i32
    %c0_i32_1 = arith.constant 0 : i32
    return %c0_i32, %c0_i32_0 : i32, i32
  }
  func.func @transform_5(%arg0: i32) -> (i32, i32) {
    %c0_i32 = arith.constant 0 : i32
    %c0_i32_0 = arith.constant 0 : i32
    %c0_i32_1 = arith.constant 0 : i32
    return %c0_i32, %c0_i32_0 : i32, i32
  }
  func.func @transform_6(%arg0: i32) -> (i32, i32, i32) {
    %c0_i32 = arith.constant 0 : i32
    %c0_i32_0 = arith.constant 0 : i32
    %c0_i32_1 = arith.constant 0 : i32
    return %arg0, %c0_i32, %c0_i32_0 : i32, i32, i32
  }
}

</mosaic_0001>

<llo_original>
// kernel: tpu_custom_call.1
$region0: #{tpu_custom_call.1}
  #allocation0 [shape = 'u32[]', space=smem, size = 0x4, offset = 0x4, fixed_abs, tag = 'smem constant byte address 0x4 - core index']
  #allocation1 [shape = 'u32[144,128]{1,0:T(1,128)}', space=vmem, size = 0x12000, scoped, tag = 'internal scratch']
  #allocation2 [shape = 'f32[4,512]{1,0:T(4,128)}', space=vmem, size = 0x2000, scoped, tag = 'scratch operand']
  #allocation3 [shape = 'f32[8,512]{1,0:T(8,128)}', space=vmem, size = 0x4000, scoped, tag = 'scratch operand']
  %s0 = inlined_call_operand.vmem [shape: f32[2,4,256], index: 0, kind: input, shape index: {}]
  %s1 = inlined_call_operand.hbm [shape: f32[8,36], index: 1, kind: input, shape index: {}]
  %s2 = inlined_call_operand.vmem [shape: f32[8,1], index: 2, kind: input, shape index: {}]
  %s3 = inlined_call_operand.hbm [shape: f32[8,72], index: 3, kind: input, shape index: {}]
  %s4 = inlined_call_operand.vmem [shape: f32[8,1], index: 4, kind: input, shape index: {}]
  %s5 = inlined_call_operand.vmem [shape: f32[2,256], index: 5, kind: input, shape index: {}]
  %s6 = inlined_call_operand.hbm [shape: f32[2,8,256], index: 6, kind: output, shape index: {}]
  %s7 = sld [smem:[#allocation0]]
  $region65: #{tpu_custom_call.1} parent=0
    _
  %s9 = ssub.s32 1, %s7
  %s10 = scalar_select 0, %s9, %s7
  $region1: #{tpu_custom_call.1} parent=0
    #allocation4 [shape = 'u8[4096]{0}', space=vmem, size = 0x1000, scoped, tag = 'input window, operand 1, single buffered']
    #allocation5 [shape = 's32[2]{0}', space=sflag, size = 0x8, scoped, tag = 'scoped memory for tpu_custom_call.1']
    #allocation6 [shape = 's32[2]{0}', space=sflag, size = 0x8, scoped, tag = 'scoped memory for tpu_custom_call.1']
    #allocation7 [shape = 'u8[4096]{0}', space=vmem, size = 0x1000, scoped, tag = 'input window, operand 3, single buffered']
    #allocation8 [shape = 's32[1]{0}', space=sflag, size = 0x4, scoped, tag = 'scoped memory for tpu_custom_call.1']
    #allocation9 [shape = 'u8[16384]{0}', space=vmem, size = 0x4000, scoped, tag = 'output window, operand 0']
    %11 = vsyncpa [#allocation5], 0
    %12 = vsyncpa [#allocation8], 0
    %13 = vsyncpa [#allocation6], 0
    %s14 = scalar_lea.sflag [#allocation6], 1
    %15 = vsyncpa %s14, 0
    loop: start=0, step=1, limit=4
    $region2: #{tpu_custom_call.1} parent=1 // loop_pre_header
      _
    $region3: #{tpu_custom_call.1} parent=1 // loop_header
      %s17 = sphi 0, %s21
      %p18 = scmp.ge.s32.totalorder %s17, 4
      %s27 = sphi 0, %s29
      %s30 = sphi 0, %s27
      %s31 = sphi 0, %s30
      %s47 = sphi 0, %s31
      %s51 = sphi 0, %s51
      %s53 = sphi 0, %s51
      %s54 = sphi 0, %s53
      %s68 = sphi 0, %s54
      %s72 = sphi 0, %s72
      %s74 = sphi 0, %s72
      %s75 = sphi 0, %s74
      %s89 = sphi 0, %s75
      %s93 = sphi 0, %s93
      %s95 = sphi 0, %s93
      %s96 = sphi 0, %s95
      %s110 = sphi 0, %s96
      %s114 = sphi 0, %s114
      %s116 = sphi 0, %s114
      %s117 = sphi 0, %s116
      %s131 = sphi 0, %s117
      %s135 = sphi 0, %s135
      %s137 = sphi 0, %s135
      %s138 = sphi 0, %s137
      %s152 = sphi 0, %s138
      %s158 = sphi 0, %s160
      %s161 = sphi 0, %s158
      %s162 = sphi 0, %s161
      %s178 = sphi 0, %s162
    $region4: #{tpu_custom_call.1} parent=1 // loop_header_branch
      %20 = sbr.rel (%p18) target = $region8
    $region5: #{tpu_custom_call.1} parent=1 // loop_body
      %s22 = ssub.s32 %s17, 1
      %s23 = ssub.s32 %s17, 2
      %s24 = sadd.s32 %s17, 1
      %s25 = ssub.s32 %s17, %s24
      %p26 = scmp.eq.s32.totalorder %s25, 0
      %s28 = sadd.s32 %s27, 1
      %s29 = scalar_select %p26, %s27, %s28
      %p32 = pneg %p26
      %p33 = scmp.eq.s32.totalorder %s17, 1
      %p34 = por %p32, %p33
      %p35 = scmp.ne.s32.totalorder %s27, %s30
      %p36 = scmp.eq.s32.totalorder %s17, 0
      %p37 = por %p35, %p36
      %p38 = scmp.ne.s32.totalorder %s27, %s30
      %p39 = scmp.eq.s32.totalorder %s22, 1
      %p40 = por %p38, %p39
      %p41 = scmp.ne.s32.totalorder %s30, %s31
      %p42 = scmp.eq.s32.totalorder %s22, 0
      %p43 = por %p41, %p42
      %p44 = scmp.ne.s32.totalorder %s30, %s31
      %p45 = scmp.eq.s32.totalorder %s23, 1
      %p46 = por %p44, %p45
      %p48 = scmp.ne.s32.totalorder %s31, %s47
      %p49 = scmp.eq.s32.totalorder %s23, 0
      %p50 = por %p48, %p49
      %s52 = sadd.s32 %s51, 1
      %p55 = scmp.eq.s32.totalorder %s17, 1
      %p56 = scmp.ne.s32.totalorder %s51, %s53
      %p57 = scmp.eq.s32.totalorder %s17, 0
      %p58 = por %p56, %p57
      %p59 = scmp.ne.s32.totalorder %s51, %s53
      %p60 = scmp.eq.s32.totalorder %s22, 1
      %p61 = por %p59, %p60
      %p62 = scmp.ne.s32.totalorder %s53, %s54
      %p63 = scmp.eq.s32.totalorder %s22, 0
      %p64 = por %p62, %p63
      %p65 = scmp.ne.s32.totalorder %s53, %s54
      %p66 = scmp.eq.s32.totalorder %s23, 1
      %p67 = por %p65, %p66
      %p69 = scmp.ne.s32.totalorder %s54, %s68
      %p70 = scmp.eq.s32.totalorder %s23, 0
      %p71 = por %p69, %p70
      %s73 = sadd.s32 %s72, 1
      %p76 = scmp.eq.s32.totalorder %s17, 1
      %p77 = scmp.ne.s32.totalorder %s72, %s74
      %p78 = scmp.eq.s32.totalorder %s17, 0
      %p79 = por %p77, %p78
      %p80 = scmp.ne.s32.totalorder %s72, %s74
      %p81 = scmp.eq.s32.totalorder %s22, 1
      %p82 = por %p80, %p81
      %p83 = scmp.ne.s32.totalorder %s74, %s75
      %p84 = scmp.eq.s32.totalorder %s22, 0
      %p85 = por %p83, %p84
      %p86 = scmp.ne.s32.totalorder %s74, %s75
      %p87 = scmp.eq.s32.totalorder %s23, 1
      %p88 = por %p86, %p87
      %p90 = scmp.ne.s32.totalorder %s75, %s89
      %p91 = scmp.eq.s32.totalorder %s23, 0
      %p92 = por %p90, %p91
      %s94 = sadd.s32 %s93, 1
      %p97 = scmp.eq.s32.totalorder %s17, 1
      %p98 = scmp.ne.s32.totalorder %s93, %s95
      %p99 = scmp.eq.s32.totalorder %s17, 0
      %p100 = por %p98, %p99
      %p101 = scmp.ne.s32.totalorder %s93, %s95
      %p102 = scmp.eq.s32.totalorder %s22, 1
      %p103 = por %p101, %p102
      %p104 = scmp.ne.s32.totalorder %s95, %s96
      %p105 = scmp.eq.s32.totalorder %s22, 0
      %p106 = por %p104, %p105
      %p107 = scmp.ne.s32.totalorder %s95, %s96
      %p108 = scmp.eq.s32.totalorder %s23, 1
      %p109 = por %p107, %p108
      %p111 = scmp.ne.s32.totalorder %s96, %s110
      %p112 = scmp.eq.s32.totalorder %s23, 0
      %p113 = por %p111, %p112
      %s115 = sadd.s32 %s114, 1
      %p118 = scmp.eq.s32.totalorder %s17, 1
      %p119 = scmp.ne.s32.totalorder %s114, %s116
      %p120 = scmp.eq.s32.totalorder %s17, 0
      %p121 = por %p119, %p120
      %p122 = scmp.ne.s32.totalorder %s114, %s116
      %p123 = scmp.eq.s32.totalorder %s22, 1
      %p124 = por %p122, %p123
      %p125 = scmp.ne.s32.totalorder %s116, %s117
      %p126 = scmp.eq.s32.totalorder %s22, 0
      %p127 = por %p125, %p126
      %p128 = scmp.ne.s32.totalorder %s116, %s117
      %p129 = scmp.eq.s32.totalorder %s23, 1
      %p130 = por %p128, %p129
      %p132 = scmp.ne.s32.totalorder %s117, %s131
      %p133 = scmp.eq.s32.totalorder %s23, 0
      %p134 = por %p132, %p133
      %s136 = sadd.s32 %s135, 1
      %p139 = scmp.eq.s32.totalorder %s17, 1
      %p140 = scmp.ne.s32.totalorder %s135, %s137
      %p141 = scmp.eq.s32.totalorder %s17, 0
      %p142 = por %p140, %p141
      %p143 = scmp.ne.s32.totalorder %s135, %s137
      %p144 = scmp.eq.s32.totalorder %s22, 1
      %p145 = por %p143, %p144
      %p146 = scmp.ne.s32.totalorder %s137, %s138
      %p147 = scmp.eq.s32.totalorder %s22, 0
      %p148 = por %p146, %p147
      %p149 = scmp.ne.s32.totalorder %s137, %s138
      %p150 = scmp.eq.s32.totalorder %s23, 1
      %p151 = por %p149, %p150
      %p153 = scmp.ne.s32.totalorder %s138, %s152
      %p154 = scmp.eq.s32.totalorder %s23, 0
      %p155 = por %p153, %p154
      %s156 = ssub.s32 %s17, %s24
      %p157 = scmp.eq.s32.totalorder %s156, 0
      %s159 = sadd.s32 %s158, 1
      %s160 = scalar_select %p157, %s158, %s159
      %p163 = pneg %p157
      %p164 = scmp.eq.s32.totalorder %s17, 1
      %p165 = por %p163, %p164
      %p166 = scmp.ne.s32.totalorder %s158, %s161
      %p167 = scmp.eq.s32.totalorder %s17, 0
      %p168 = por %p166, %p167
      %p169 = scmp.ne.s32.totalorder %s158, %s161
      %p170 = scmp.eq.s32.totalorder %s22, 1
      %p171 = por %p169, %p170
      %p172 = scmp.ne.s32.totalorder %s161, %s162
      %p173 = scmp.eq.s32.totalorder %s22, 0
      %p174 = por %p172, %p173
      %p175 = scmp.ne.s32.totalorder %s161, %s162
      %p176 = scmp.eq.s32.totalorder %s23, 1
      %p177 = por %p175, %p176
      %p179 = scmp.ne.s32.totalorder %s162, %s178
      %p180 = scmp.eq.s32.totalorder %s23, 0
      %p181 = por %p179, %p180
      %p182 = scmp.le.s32.totalorder 1, %s17
      %p183 = scmp.lt.s32.totalorder %s17, 3
      %p184 = pnand %p182, %p183
      %p185 = pneg %p184
      // Predicated region
      $region9: #{tpu_custom_call.1} parent=5 // pred_check
        _
      $region10: #{tpu_custom_call.1} parent=5 // pred_check_branch
        %187 = sbr.rel (%p184) target = $region12
      $region11: #{tpu_custom_call.1} parent=5 // pred_region
        %s188 = ssub.s32 %s17, 1
        // Predicated region
        $region13: #{tpu_custom_call.1} parent=11 // pred_check
          %p189 = pneg %p64
        $region14: #{tpu_custom_call.1} parent=11 // pred_check_branch
          %191 = sbr.rel (%p189) target = $region16
        $region15: #{tpu_custom_call.1} parent=11 // pred_region
          %s193 = ssub.s32 128, 128
          %194 = vsyncadd [#allocation5], %s193
          %s196 = sshll.u32 [#allocation4], 4
          %s197 = int_to_ptr.vmem [resolvable:$true] %s196
          %199 = dma.hbm_to_vmem [thread:$0]  %s1, 128, %s197, [#allocation5]
        $region16: #{tpu_custom_call.1} parent=11 // pred_fallthru
          _
        // Predicated region
        $region17: #{tpu_custom_call.1} parent=11 // pred_check
          %p200 = pneg %p85
        $region18: #{tpu_custom_call.1} parent=11 // pred_check_branch
          %202 = sbr.rel (%p200) target = $region20
        $region19: #{tpu_custom_call.1} parent=11 // pred_region
          _
        $region20: #{tpu_custom_call.1} parent=11 // pred_fallthru
          _
        // Predicated region
        $region21: #{tpu_custom_call.1} parent=11 // pred_check
          %p203 = pneg %p106
        $region22: #{tpu_custom_call.1} parent=11 // pred_check_branch
          %205 = sbr.rel (%p203) target = $region24
        $region23: #{tpu_custom_call.1} parent=11 // pred_region
          %s207 = ssub.s32 128, 128
          %208 = vsyncadd [#allocation8], %s207
          %s210 = sshll.u32 [#allocation7], 4
          %s211 = int_to_ptr.vmem [resolvable:$true] %s210
          %213 = dma.hbm_to_vmem [thread:$0]  %s3, 128, %s211, [#allocation8]
        $region24: #{tpu_custom_call.1} parent=11 // pred_fallthru
          _
        // Predicated region
        $region25: #{tpu_custom_call.1} parent=11 // pred_check
          %p214 = pneg %p127
        $region26: #{tpu_custom_call.1} parent=11 // pred_check_branch
          %216 = sbr.rel (%p214) target = $region28
        $region27: #{tpu_custom_call.1} parent=11 // pred_region
          _
        $region28: #{tpu_custom_call.1} parent=11 // pred_fallthru
          _
        // Predicated region
        $region29: #{tpu_custom_call.1} parent=11 // pred_check
          %p217 = pneg %p148
        $region30: #{tpu_custom_call.1} parent=11 // pred_check_branch
          %219 = sbr.rel (%p217) target = $region32
        $region31: #{tpu_custom_call.1} parent=11 // pred_region
          _
        $region32: #{tpu_custom_call.1} parent=11 // pred_fallthru
          _
      $region12: #{tpu_custom_call.1} parent=5 // pred_fallthru
        _
      %p220 = scmp.lt.s32.totalorder %s17, 2
      // Predicated region
      $region33: #{tpu_custom_call.1} parent=5 // pred_check
        %p221 = pneg %p220
      $region34: #{tpu_custom_call.1} parent=5 // pred_check_branch
        %223 = sbr.rel (%p221) target = $region36
      $region35: #{tpu_custom_call.1} parent=5 // pred_region
        // Predicated region
        $region37: #{tpu_custom_call.1} parent=35 // pred_check
          %p224 = pneg %p37
        $region38: #{tpu_custom_call.1} parent=35 // pred_check_branch
          %226 = sbr.rel (%p224) target = $region40
        $region39: #{tpu_custom_call.1} parent=35 // pred_region
          %p227 = scmp.lt.s32.totalorder %s17, 1
          %s228 = scalar_select %p227, %s17, 1
          %s229 = smul.addr %s228, 2
          %s230 = smul.addr %s229, 4
          %s231 = scalar_lea.vmem %s0, %s230
        $region40: #{tpu_custom_call.1} parent=35 // pred_fallthru
          _
      $region36: #{tpu_custom_call.1} parent=5 // pred_fallthru
        _
      %p232 = scmp.le.s32.totalorder 1, %s17
      %p233 = scmp.lt.s32.totalorder %s17, 3
      %p234 = pnand %p232, %p233
      %p235 = pneg %p234
      // Predicated region
      $region41: #{tpu_custom_call.1} parent=5 // pred_check
        _
      $region42: #{tpu_custom_call.1} parent=5 // pred_check_branch
        %237 = sbr.rel (%p234) target = $region44
      $region43: #{tpu_custom_call.1} parent=5 // pred_region
        %s238 = ssub.s32 %s17, 1
        // Predicated region
        $region45: #{tpu_custom_call.1} parent=43 // pred_check
          %p239 = pneg %p64
        $region46: #{tpu_custom_call.1} parent=43 // pred_check_branch
          %241 = sbr.rel (%p239) target = $region48
        $region47: #{tpu_custom_call.1} parent=43 // pred_region
          %242 = dma.done [#allocation5], 128
        $region48: #{tpu_custom_call.1} parent=43 // pred_fallthru
          _
        // Predicated region
        $region49: #{tpu_custom_call.1} parent=43 // pred_check
          %p243 = pneg %p106
        $region50: #{tpu_custom_call.1} parent=43 // pred_check_branch
          %245 = sbr.rel (%p243) target = $region52
        $region51: #{tpu_custom_call.1} parent=43 // pred_region
          %246 = dma.done [#allocation8], 128
        $region52: #{tpu_custom_call.1} parent=43 // pred_fallthru
          _
        %p247 = scmp.lt.s32.totalorder %s22, 1
        %s248 = scalar_select %p247, %s22, 1
        %s249 = smul.addr %s248, 2
        %s250 = smul.addr %s249, 4
        %s251 = scalar_lea.vmem %s0, %s250
        %p252 = pneg %p43
        %p253 = pneg %p40
        %p254 = pneg %p64
        %p255 = pneg %p61
        %p256 = pneg %p85
        %p257 = pneg %p82
        %p258 = pneg %p106
        %p259 = pneg %p103
        %p260 = pneg %p127
        %p261 = pneg %p124
        %p262 = pneg %p148
        %p263 = pneg %p145
        %p264 = pneg %p174
        %p265 = pneg %p171
        %s266 = sand.u32 %s161, 1
        %s267 = scalar_lea.sflag [#allocation6], %s266
        %s268 = sand.u32 %s161, 1
        %s269 = smul.addr %s268, 16
        %s270 = scalar_lea.vmem [#allocation9], %s269
        %p271 = scmp.lt.s32.totalorder %s22, 1
        %s272 = scalar_select %p271, %s22, 1
        %s273 = smul.addr %s272, 2
        %s274 = smul.addr %s273, 4
        %s275 = scalar_lea.vmem %s0, %s274
        %v276 = vld [vmem:[%s5] ss:$2 sm:$0x3]
        %s277 = scalar_lea.vmem %s5, 1
        %v278 = vld [vmem:[%s277] ss:$2 sm:$0x3]
        %279 = vst [vmem:[#allocation2] sm:$0xf] 0.0
        %280 = vst [vmem:[#allocation2 + $0xc] sm:$0xf] 0.0
        %281 = vst [vmem:[#allocation3] sm:$0xff] 0.0
        %282 = vst [vmem:[#allocation3 + $0x18] sm:$0xff] 0.0
        %v283 = vld [vmem:[%s275] sm:$0xff]
        %284 = vst [vmem:[#allocation2 + $0x4] sm:$0xff] %v283
        %v285 = vld [vmem:[#allocation2] sm:$0xff]
        %v286 = vld [vmem:[#allocation2 + $0x8] sm:$0xf]
        %v288 = vlaneseq
        %v289 = vshrl.u32 %v288, 7
        %v290 = vsub.s32 0, %v289
        %v291 = vrot.slane %v276, %v290
        %v292 = vlaneseq
        %v293 = vshrl.u32 %v292, 7
        %v294 = vsub.s32 1, %v293
        %v295 = vrot.slane %v276, %v294
        %v296 = vcombine.low %v291, %v295
        %297 = vrot.lane.b32.xlu0 %v296, 111
        %v298 = vpop.permute.xlu0 %297
        %v299 = vrot.slane %v298, 4
        %vm300 = vcmask 908288
        %v301 = vsel %vm300, %v299, %v298
        %v304 = vmul.f32 %v285, %v301
        %v305 = vmul.f32 %v286, %v299
        %v306 = vld [vmem:[#allocation4] sm:$0xff]
        %308 = vrot.lane.b32.xlu0 %v306, 124
        %v309 = vpop.permute.xlu0 %308
        %v312 = vcombine.high %v285, %v285
        %313 = vrot.lane.b32.xlu0 %v285, 16
        %v314 = vpop.permute.xlu0 %313
        %315 = vrot.lane.b32.xlu0 %v312, 16
        %v316 = vpop.permute.xlu0 %315
        %317 = vrot.lane.b32.xlu0 %v286, 16
        %v318 = vpop.permute.xlu0 %317
        %vm319 = vcmask 130048
        %v320 = vsel %vm319, %v314, %v316
        %v321 = vsel %vm319, %v316, %v318
        %vm322 = vcmask 31744
        %v323 = vsel %vm322, %v309, 0
        %vm325 = vcmask 1043456
        %v326 = vsel %vm325, %v320, 0
        %v328 = vsel %vm325, %v321, 0
        %330 = vmatprep.subr.mxu0 0.0
        %331 = vmatpush1.msra.mxu0 0.0
        %332 = vmatprep.subr.mxu0 0.0
        %333 = vmatpush1.msra.mxu0 0.0
        %334 = vmatprep.subr.mxu0 0.0
        %335 = vmatpush1.msra.mxu0 0.0
        %336 = vmatprep.subr.mxu0 0.0
        %337 = vmatpush1.msra.mxu0 0.0
        %338 = vmatprep.subr.mxu0 0.0
        %339 = vmatpush1.msra.mxu0 0.0
        %340 = vmatprep.subr.mxu0 0.0
        %341 = vmatpush1.msra.mxu0 0.0
        %342 = vmatprep.subr.mxu0 0.0
        %343 = vmatpush1.msra.mxu0 0.0
        %344 = vmatprep.subr.mxu0 0.0
        %345 = vmatpush1.msra.mxu0 0.0
        %346 = vmatprep.subr.mxu0 0.0
        %347 = vmatpush1.msra.mxu0 0.0
        %348 = vmatprep.subr.mxu0 0.0
        %349 = vmatpush1.msra.mxu0 0.0
        %350 = vmatprep.subr.mxu0 0.0
        %351 = vmatpush1.msra.mxu0 0.0
        %352 = vmatprep.subr.mxu0 0.0
        %353 = vmatpush1.msra.mxu0 0.0
        %354 = vmatprep.subr.mxu0 0.0
        %355 = vmatpush1.msra.mxu0 0.0
        %356 = vmatprep.subr.mxu0 0.0
        %357 = vmatpush1.msra.mxu0 0.0
        %358 = vmatprep.subr.mxu0 0.0
        %359 = vmatpush1.msra.mxu0 0.0
        %360 = vmatprep.subr.mxu0 %v328
        %361 = vmatpush1.msra.mxu0 %v326
        %362 = vmatprep.subr.mxu0 0.0
        %363 = vmatpush2.msra.mxu0 0.0
        %364 = vmatprep.subr.mxu0 0.0
        %365 = vmatpush2.msra.mxu0 0.0
        %366 = vmatprep.subr.mxu0 0.0
        %367 = vmatpush2.msra.mxu0 0.0
        %368 = vmatprep.subr.mxu0 0.0
        %369 = vmatpush2.msra.mxu0 0.0
        %370 = vmatprep.subr.mxu0 0.0
        %371 = vmatpush2.msra.mxu0 0.0
        %372 = vmatprep.subr.mxu0 0.0
        %373 = vmatpush2.msra.mxu0 0.0
        %374 = vmatprep.subr.mxu0 0.0
        %375 = vmatpush2.msra.mxu0 0.0
        %376 = vmatprep.subr.mxu0 0.0
        %377 = vmatpush2.msra.mxu0 0.0
        %378 = vmatprep.subr.mxu0 0.0
        %379 = vmatpush2.msra.mxu0 0.0
        %380 = vmatprep.subr.mxu0 0.0
        %381 = vmatpush2.msra.mxu0 0.0
        %382 = vmatprep.subr.mxu0 0.0
        %383 = vmatpush2.msra.mxu0 0.0
        %384 = vmatprep.subr.mxu0 0.0
        %385 = vmatpush2.msra.mxu0 0.0
        %386 = vmatprep.subr.mxu0 0.0
        %387 = vmatpush2.msra.mxu0 0.0
        %388 = vmatprep.subr.mxu0 0.0
        %389 = vmatpush2.msra.mxu0 0.0
        %390 = vmatprep.subr.mxu0 0.0
        %391 = vmatpush2.msra.mxu0 0.0
        %392 = vmatprep.subr.mxu0 0.0
        %393 = vmatpush2.msra.mxu0 0.0
        %394 = vmatprep.mubr.f32.mxu0 0.0
        %395 = vmatmul.mubr.f32.gmra.mxu0 %v323
        %v396 = vpop.f32.mrf.mxu0
        %v397 = vadd.f32 0.0, %v396
        %v398 = vpop.f32.mrf.mxu0
        %v399 = vadd.f32 0.0, %v398
        %400 = vdwg.mxu0
        %v403 = vcombine.high %v304, %v304
        %404 = vrot.lane.b32.xlu0 %v304, 17
        %v405 = vpop.permute.xlu0 %404
        %406 = vrot.lane.b32.xlu0 %v403, 17
        %v407 = vpop.permute.xlu0 %406
        %408 = vrot.lane.b32.xlu0 %v305, 17
        %v409 = vpop.permute.xlu0 %408
        %vm410 = vcmask 138240
        %v411 = vsel %vm410, %v405, %v407
        %v412 = vsel %vm410, %v407, %v409
        %v413 = vsel %vm322, %v306, 0
        %v415 = vsel %vm325, %v411, 0
        %v417 = vsel %vm325, %v412, 0
        %419 = vmatprep.subr.mxu0 0.0
        %420 = vmatpush1.msra.mxu0 0.0
        %421 = vmatprep.subr.mxu0 0.0
        %422 = vmatpush1.msra.mxu0 0.0
        %423 = vmatprep.subr.mxu0 0.0
        %424 = vmatpush1.msra.mxu0 0.0
        %425 = vmatprep.subr.mxu0 0.0
        %426 = vmatpush1.msra.mxu0 0.0
        %427 = vmatprep.subr.mxu0 0.0
        %428 = vmatpush1.msra.mxu0 0.0
        %429 = vmatprep.subr.mxu0 0.0
        %430 = vmatpush1.msra.mxu0 0.0
        %431 = vmatprep.subr.mxu0 0.0
        %432 = vmatpush1.msra.mxu0 0.0
        %433 = vmatprep.subr.mxu0 0.0
        %434 = vmatpush1.msra.mxu0 0.0
        %435 = vmatprep.subr.mxu0 0.0
        %436 = vmatpush1.msra.mxu0 0.0
        %437 = vmatprep.subr.mxu0 0.0
        %438 = vmatpush1.msra.mxu0 0.0
        %439 = vmatprep.subr.mxu0 0.0
        %440 = vmatpush1.msra.mxu0 0.0
        %441 = vmatprep.subr.mxu0 0.0
        %442 = vmatpush1.msra.mxu0 0.0
        %443 = vmatprep.subr.mxu0 0.0
        %444 = vmatpush1.msra.mxu0 0.0
        %445 = vmatprep.subr.mxu0 0.0
        %446 = vmatpush1.msra.mxu0 0.0
        %447 = vmatprep.subr.mxu0 0.0
        %448 = vmatpush1.msra.mxu0 0.0
        %449 = vmatprep.subr.mxu0 %v417
        %450 = vmatpush1.msra.mxu0 %v415
        %451 = vmatprep.subr.mxu0 0.0
        %452 = vmatpush2.msra.mxu0 0.0
        %453 = vmatprep.subr.mxu0 0.0
        %454 = vmatpush2.msra.mxu0 0.0
        %455 = vmatprep.subr.mxu0 0.0
        %456 = vmatpush2.msra.mxu0 0.0
        %457 = vmatprep.subr.mxu0 0.0
        %458 = vmatpush2.msra.mxu0 0.0
        %459 = vmatprep.subr.mxu0 0.0
        %460 = vmatpush2.msra.mxu0 0.0
        %461 = vmatprep.subr.mxu0 0.0
        %462 = vmatpush2.msra.mxu0 0.0
        %463 = vmatprep.subr.mxu0 0.0
        %464 = vmatpush2.msra.mxu0 0.0
        %465 = vmatprep.subr.mxu0 0.0
        %466 = vmatpush2.msra.mxu0 0.0
        %467 = vmatprep.subr.mxu0 0.0
        %468 = vmatpush2.msra.mxu0 0.0
        %469 = vmatprep.subr.mxu0 0.0
        %470 = vmatpush2.msra.mxu0 0.0
        %471 = vmatprep.subr.mxu0 0.0
        %472 = vmatpush2.msra.mxu0 0.0
        %473 = vmatprep.subr.mxu0 0.0
        %474 = vmatpush2.msra.mxu0 0.0
        %475 = vmatprep.subr.mxu0 0.0
        %476 = vmatpush2.msra.mxu0 0.0
        %477 = vmatprep.subr.mxu0 0.0
        %478 = vmatpush2.msra.mxu0 0.0
        %479 = vmatprep.subr.mxu0 0.0
        %480 = vmatpush2.msra.mxu0 0.0
        %481 = vmatprep.subr.mxu0 0.0
        %482 = vmatpush2.msra.mxu0 0.0
        %483 = vmatprep.mubr.f32.mxu0 0.0
        %484 = vmatmul.mubr.f32.gmra.mxu0 %v413
        %v485 = vpop.f32.mrf.mxu0
        %v486 = vadd.f32 %v397, %v485
        %v487 = vpop.f32.mrf.mxu0
        %v488 = vadd.f32 %v399, %v487
        %489 = vdwg.mxu0
        %v490 = vld [vmem:[#allocation2] sm:$0xff]
        %v491 = vld [vmem:[#allocation2 + $0x8] sm:$0xf]
        %v493 = vlaneseq
        %v494 = vshrl.u32 %v493, 7
        %v495 = vsub.s32 0, %v494
        %v496 = vrot.slane %v278, %v495
        %v497 = vlaneseq
        %v498 = vshrl.u32 %v497, 7
        %v499 = vsub.s32 1, %v498
        %v500 = vrot.slane %v278, %v499
        %v501 = vcombine.low %v496, %v500
        %502 = vrot.lane.b32.xlu0 %v501, 113
        %v503 = vpop.permute.xlu0 %502
        %v504 = vrot.slane %v503, 4
        %vm505 = vcmask 924672
        %v506 = vsel %vm505, %v504, %v503
        %v509 = vmul.f32 %v490, %v506
        %v510 = vmul.f32 %v491, %v504
        %v511 = vld [vmem:[#allocation4] sm:$0xff]
        %513 = vrot.lane.b32.xlu0 %v511, 120
        %v514 = vpop.permute.xlu0 %513
        %v517 = vcombine.high %v509, %v509
        %518 = vrot.lane.b32.xlu0 %v509, 15
        %v519 = vpop.permute.xlu0 %518
        %520 = vrot.lane.b32.xlu0 %v517, 15
        %v521 = vpop.permute.xlu0 %520
        %522 = vrot.lane.b32.xlu0 %v510, 15
        %v523 = vpop.permute.xlu0 %522
        %vm524 = vcmask 121856
        %v525 = vsel %vm524, %v519, %v521
        %v526 = vsel %vm524, %v521, %v523
        %v527 = vsel %vm322, %v514, 0
        %v529 = vsel %vm325, %v525, 0
        %v531 = vsel %vm325, %v526, 0
        %533 = vmatprep.subr.mxu0 0.0
        %534 = vmatpush1.msra.mxu0 0.0
        %535 = vmatprep.subr.mxu0 0.0
        %536 = vmatpush1.msra.mxu0 0.0
        %537 = vmatprep.subr.mxu0 0.0
        %538 = vmatpush1.msra.mxu0 0.0
        %539 = vmatprep.subr.mxu0 0.0
        %540 = vmatpush1.msra.mxu0 0.0
        %541 = vmatprep.subr.mxu0 0.0
        %542 = vmatpush1.msra.mxu0 0.0
        %543 = vmatprep.subr.mxu0 0.0
        %544 = vmatpush1.msra.mxu0 0.0
        %545 = vmatprep.subr.mxu0 0.0
        %546 = vmatpush1.msra.mxu0 0.0
        %547 = vmatprep.subr.mxu0 0.0
        %548 = vmatpush1.msra.mxu0 0.0
        %549 = vmatprep.subr.mxu0 0.0
        %550 = vmatpush1.msra.mxu0 0.0
        %551 = vmatprep.subr.mxu0 0.0
        %552 = vmatpush1.msra.mxu0 0.0
        %553 = vmatprep.subr.mxu0 0.0
        %554 = vmatpush1.msra.mxu0 0.0
        %555 = vmatprep.subr.mxu0 0.0
        %556 = vmatpush1.msra.mxu0 0.0
        %557 = vmatprep.subr.mxu0 0.0
        %558 = vmatpush1.msra.mxu0 0.0
        %559 = vmatprep.subr.mxu0 0.0
        %560 = vmatpush1.msra.mxu0 0.0
        %561 = vmatprep.subr.mxu0 0.0
        %562 = vmatpush1.msra.mxu0 0.0
        %563 = vmatprep.subr.mxu0 %v531
        %564 = vmatpush1.msra.mxu0 %v529
        %565 = vmatprep.subr.mxu0 0.0
        %566 = vmatpush2.msra.mxu0 0.0
        %567 = vmatprep.subr.mxu0 0.0
        %568 = vmatpush2.msra.mxu0 0.0
        %569 = vmatprep.subr.mxu0 0.0
        %570 = vmatpush2.msra.mxu0 0.0
        %571 = vmatprep.subr.mxu0 0.0
        %572 = vmatpush2.msra.mxu0 0.0
        %573 = vmatprep.subr.mxu0 0.0
        %574 = vmatpush2.msra.mxu0 0.0
        %575 = vmatprep.subr.mxu0 0.0
        %576 = vmatpush2.msra.mxu0 0.0
        %577 = vmatprep.subr.mxu0 0.0
        %578 = vmatpush2.msra.mxu0 0.0
        %579 = vmatprep.subr.mxu0 0.0
        %580 = vmatpush2.msra.mxu0 0.0
        %581 = vmatprep.subr.mxu0 0.0
        %582 = vmatpush2.msra.mxu0 0.0
        %583 = vmatprep.subr.mxu0 0.0
        %584 = vmatpush2.msra.mxu0 0.0
        %585 = vmatprep.subr.mxu0 0.0
        %586 = vmatpush2.msra.mxu0 0.0
        %587 = vmatprep.subr.mxu0 0.0
        %588 = vmatpush2.msra.mxu0 0.0
        %589 = vmatprep.subr.mxu0 0.0
        %590 = vmatpush2.msra.mxu0 0.0
        %591 = vmatprep.subr.mxu0 0.0
        %592 = vmatpush2.msra.mxu0 0.0
        %593 = vmatprep.subr.mxu0 0.0
        %594 = vmatpush2.msra.mxu0 0.0
        %595 = vmatprep.subr.mxu0 0.0
        %596 = vmatpush2.msra.mxu0 0.0
        %597 = vmatprep.mubr.f32.mxu0 0.0
        %598 = vmatmul.mubr.f32.gmra.mxu0 %v527
        %v599 = vpop.f32.mrf.mxu0
        %v600 = vadd.f32 0.0, %v599
        %v601 = vpop.f32.mrf.mxu0
        %v602 = vadd.f32 0.0, %v601
        %603 = vdwg.mxu0
        %v604 = vadd.f32 %v486, %v600
        %v605 = vadd.f32 %v488, %v602
        %v606 = vld [vmem:[#allocation2] sm:$0xff]
        %v607 = vld [vmem:[#allocation2 + $0x8] sm:$0xf]
        %608 = vrot.lane.b32.xlu0 %v296, 127
        %v609 = vpop.permute.xlu0 %608
        %v610 = vrot.slane %v609, 4
        %vm611 = vcmask 1039360
        %v612 = vsel %vm611, %v610, %v609
        %v615 = vmul.f32 %v606, %v612
        %v616 = vmul.f32 %v607, %v610
        %v617 = vld [vmem:[#allocation4] sm:$0xff]
        %619 = vrot.lane.b32.xlu0 %v617, 116
        %v620 = vpop.permute.xlu0 %619
        %v623 = vcombine.high %v615, %v615
        %624 = vrot.lane.b32.xlu0 %v615, 1
        %v625 = vpop.permute.xlu0 %624
        %626 = vrot.lane.b32.xlu0 %v623, 1
        %v627 = vpop.permute.xlu0 %626
        %628 = vrot.lane.b32.xlu0 %v616, 1
        %v629 = vpop.permute.xlu0 %628
        %vm630 = vcmask 7168
        %v631 = vsel %vm630, %v625, %v627
        %v632 = vsel %vm630, %v627, %v629
        %v633 = vsel %vm322, %v620, 0
        %v635 = vsel %vm325, %v631, 0
        %v637 = vsel %vm325, %v632, 0
        %639 = vmatprep.subr.mxu0 0.0
        %640 = vmatpush1.msra.mxu0 0.0
        %641 = vmatprep.subr.mxu0 0.0
        %642 = vmatpush1.msra.mxu0 0.0
        %643 = vmatprep.subr.mxu0 0.0
        %644 = vmatpush1.msra.mxu0 0.0
        %645 = vmatprep.subr.mxu0 0.0
        %646 = vmatpush1.msra.mxu0 0.0
        %647 = vmatprep.subr.mxu0 0.0
        %648 = vmatpush1.msra.mxu0 0.0
        %649 = vmatprep.subr.mxu0 0.0
        %650 = vmatpush1.msra.mxu0 0.0
        %651 = vmatprep.subr.mxu0 0.0
        %652 = vmatpush1.msra.mxu0 0.0
        %653 = vmatprep.subr.mxu0 0.0
        %654 = vmatpush1.msra.mxu0 0.0
        %655 = vmatprep.subr.mxu0 0.0
        %656 = vmatpush1.msra.mxu0 0.0
        %657 = vmatprep.subr.mxu0 0.0
        %658 = vmatpush1.msra.mxu0 0.0
        %659 = vmatprep.subr.mxu0 0.0
        %660 = vmatpush1.msra.mxu0 0.0
        %661 = vmatprep.subr.mxu0 0.0
        %662 = vmatpush1.msra.mxu0 0.0
        %663 = vmatprep.subr.mxu0 0.0
        %664 = vmatpush1.msra.mxu0 0.0
        %665 = vmatprep.subr.mxu0 0.0
        %666 = vmatpush1.msra.mxu0 0.0
        %667 = vmatprep.subr.mxu0 0.0
        %668 = vmatpush1.msra.mxu0 0.0
        %669 = vmatprep.subr.mxu0 %v637
        %670 = vmatpush1.msra.mxu0 %v635
        %671 = vmatprep.subr.mxu0 0.0
        %672 = vmatpush2.msra.mxu0 0.0
        %673 = vmatprep.subr.mxu0 0.0
        %674 = vmatpush2.msra.mxu0 0.0
        %675 = vmatprep.subr.mxu0 0.0
        %676 = vmatpush2.msra.mxu0 0.0
        %677 = vmatprep.subr.mxu0 0.0
        %678 = vmatpush2.msra.mxu0 0.0
        %679 = vmatprep.subr.mxu0 0.0
        %680 = vmatpush2.msra.mxu0 0.0
        %681 = vmatprep.subr.mxu0 0.0
        %682 = vmatpush2.msra.mxu0 0.0
        %683 = vmatprep.subr.mxu0 0.0
        %684 = vmatpush2.msra.mxu0 0.0
        %685 = vmatprep.subr.mxu0 0.0
        %686 = vmatpush2.msra.mxu0 0.0
        %687 = vmatprep.subr.mxu0 0.0
        %688 = vmatpush2.msra.mxu0 0.0
        %689 = vmatprep.subr.mxu0 0.0
        %690 = vmatpush2.msra.mxu0 0.0
        %691 = vmatprep.subr.mxu0 0.0
        %692 = vmatpush2.msra.mxu0 0.0
        %693 = vmatprep.subr.mxu0 0.0
        %694 = vmatpush2.msra.mxu0 0.0
        %695 = vmatprep.subr.mxu0 0.0
        %696 = vmatpush2.msra.mxu0 0.0
        %697 = vmatprep.subr.mxu0 0.0
        %698 = vmatpush2.msra.mxu0 0.0
        %699 = vmatprep.subr.mxu0 0.0
        %700 = vmatpush2.msra.mxu0 0.0
        %701 = vmatprep.subr.mxu0 0.0
        %702 = vmatpush2.msra.mxu0 0.0
        %703 = vmatprep.mubr.f32.mxu0 0.0
        %704 = vmatmul.mubr.f32.gmra.mxu0 %v633
        %v705 = vpop.f32.mrf.mxu0
        %v706 = vadd.f32 0.0, %v705
        %v707 = vpop.f32.mrf.mxu0
        %v708 = vadd.f32 0.0, %v707
        %709 = vdwg.mxu0
        %v710 = vadd.f32 %v604, %v706
        %v711 = vadd.f32 %v605, %v708
        %v712 = vld [vmem:[#allocation2 + $0x4] sm:$0xff]
        %v713 = vld [vmem:[#allocation4] sm:$0xff]
        %715 = vrot.lane.b32.xlu0 %v713, 112
        %v716 = vpop.permute.xlu0 %715
        %v718 = vcombine.high %v712, %v712
        %v719 = vsel %vm322, %v716, 0
        %v721 = vsel %vm325, %v712, 0
        %v723 = vsel %vm325, %v718, 0
        %725 = vmatprep.subr.mxu0 0.0
        %726 = vmatpush1.msra.mxu0 0.0
        %727 = vmatprep.subr.mxu0 0.0
        %728 = vmatpush1.msra.mxu0 0.0
        %729 = vmatprep.subr.mxu0 0.0
        %730 = vmatpush1.msra.mxu0 0.0
        %731 = vmatprep.subr.mxu0 0.0
        %732 = vmatpush1.msra.mxu0 0.0
        %733 = vmatprep.subr.mxu0 0.0
        %734 = vmatpush1.msra.mxu0 0.0
        %735 = vmatprep.subr.mxu0 0.0
        %736 = vmatpush1.msra.mxu0 0.0
        %737 = vmatprep.subr.mxu0 0.0
        %738 = vmatpush1.msra.mxu0 0.0
        %739 = vmatprep.subr.mxu0 0.0
        %740 = vmatpush1.msra.mxu0 0.0
        %741 = vmatprep.subr.mxu0 0.0
        %742 = vmatpush1.msra.mxu0 0.0
        %743 = vmatprep.subr.mxu0 0.0
        %744 = vmatpush1.msra.mxu0 0.0
        %745 = vmatprep.subr.mxu0 0.0
        %746 = vmatpush1.msra.mxu0 0.0
        %747 = vmatprep.subr.mxu0 0.0
        %748 = vmatpush1.msra.mxu0 0.0
        %749 = vmatprep.subr.mxu0 0.0
        %750 = vmatpush1.msra.mxu0 0.0
        %751 = vmatprep.subr.mxu0 0.0
        %752 = vmatpush1.msra.mxu0 0.0
        %753 = vmatprep.subr.mxu0 0.0
        %754 = vmatpush1.msra.mxu0 0.0
        %755 = vmatprep.subr.mxu0 %v723
        %756 = vmatpush1.msra.mxu0 %v721
        %757 = vmatprep.subr.mxu0 0.0
        %758 = vmatpush2.msra.mxu0 0.0
        %759 = vmatprep.subr.mxu0 0.0
        %760 = vmatpush2.msra.mxu0 0.0
        %761 = vmatprep.subr.mxu0 0.0
        %762 = vmatpush2.msra.mxu0 0.0
        %763 = vmatprep.subr.mxu0 0.0
        %764 = vmatpush2.msra.mxu0 0.0
        %765 = vmatprep.subr.mxu0 0.0
        %766 = vmatpush2.msra.mxu0 0.0
        %767 = vmatprep.subr.mxu0 0.0
        %768 = vmatpush2.msra.mxu0 0.0
        %769 = vmatprep.subr.mxu0 0.0
        %770 = vmatpush2.msra.mxu0 0.0
        %771 = vmatprep.subr.mxu0 0.0
        %772 = vmatpush2.msra.mxu0 0.0
        %773 = vmatprep.subr.mxu0 0.0
        %774 = vmatpush2.msra.mxu0 0.0
        %775 = vmatprep.subr.mxu0 0.0
        %776 = vmatpush2.msra.mxu0 0.0
        %777 = vmatprep.subr.mxu0 0.0
        %778 = vmatpush2.msra.mxu0 0.0
        %779 = vmatprep.subr.mxu0 0.0
        %780 = vmatpush2.msra.mxu0 0.0
        %781 = vmatprep.subr.mxu0 0.0
        %782 = vmatpush2.msra.mxu0 0.0
        %783 = vmatprep.subr.mxu0 0.0
        %784 = vmatpush2.msra.mxu0 0.0
        %785 = vmatprep.subr.mxu0 0.0
        %786 = vmatpush2.msra.mxu0 0.0
        %787 = vmatprep.subr.mxu0 0.0
        %788 = vmatpush2.msra.mxu0 0.0
        %789 = vmatprep.mubr.f32.mxu0 0.0
        %790 = vmatmul.mubr.f32.gmra.mxu0 %v719
        %v791 = vpop.f32.mrf.mxu0
        %v792 = vadd.f32 0.0, %v791
        %v793 = vpop.f32.mrf.mxu0
        %v794 = vadd.f32 0.0, %v793
        %795 = vdwg.mxu0
        %v796 = vadd.f32 %v710, %v792
        %v797 = vadd.f32 %v711, %v794
        %v798 = vld [vmem:[#allocation2 + $0x4] sm:$0xff]
        %v799 = vld [vmem:[#allocation2 + $0xc] sm:$0xf]
        %800 = vrot.lane.b32.xlu0 %v501, 1
        %v801 = vpop.permute.xlu0 %800
        %v802 = vrot.slane %v801, 4
        %v803 = vsel %vm630, %v802, %v801
        %v806 = vmul.f32 %v798, %v803
        %v807 = vmul.f32 %v799, %v802
        %v808 = vld [vmem:[#allocation4] sm:$0xff]
        %810 = vrot.lane.b32.xlu0 %v808, 108
        %v811 = vpop.permute.xlu0 %810
        %v814 = vcombine.high %v806, %v806
        %815 = vrot.lane.b32.xlu0 %v806, 127
        %v816 = vpop.permute.xlu0 %815
        %817 = vrot.lane.b32.xlu0 %v814, 127
        %v818 = vpop.permute.xlu0 %817
        %819 = vrot.lane.b32.xlu0 %v807, 127
        %v820 = vpop.permute.xlu0 %819
        %v821 = vsel %vm611, %v816, %v818
        %v822 = vsel %vm611, %v818, %v820
        %v823 = vsel %vm322, %v811, 0
        %v825 = vsel %vm325, %v821, 0
        %v827 = vsel %vm325, %v822, 0
        %829 = vmatprep.subr.mxu0 0.0
        %830 = vmatpush1.msra.mxu0 0.0
        %831 = vmatprep.subr.mxu0 0.0
        %832 = vmatpush1.msra.mxu0 0.0
        %833 = vmatprep.subr.mxu0 0.0
        %834 = vmatpush1.msra.mxu0 0.0
        %835 = vmatprep.subr.mxu0 0.0
        %836 = vmatpush1.msra.mxu0 0.0
        %837 = vmatprep.subr.mxu0 0.0
        %838 = vmatpush1.msra.mxu0 0.0
        %839 = vmatprep.subr.mxu0 0.0
        %840 = vmatpush1.msra.mxu0 0.0
        %841 = vmatprep.subr.mxu0 0.0
        %842 = vmatpush1.msra.mxu0 0.0
        %843 = vmatprep.subr.mxu0 0.0
        %844 = vmatpush1.msra.mxu0 0.0
        %845 = vmatprep.subr.mxu0 0.0
        %846 = vmatpush1.msra.mxu0 0.0
        %847 = vmatprep.subr.mxu0 0.0
        %848 = vmatpush1.msra.mxu0 0.0
        %849 = vmatprep.subr.mxu0 0.0
        %850 = vmatpush1.msra.mxu0 0.0
        %851 = vmatprep.subr.mxu0 0.0
        %852 = vmatpush1.msra.mxu0 0.0
        %853 = vmatprep.subr.mxu0 0.0
        %854 = vmatpush1.msra.mxu0 0.0
        %855 = vmatprep.subr.mxu0 0.0
        %856 = vmatpush1.msra.mxu0 0.0
        %857 = vmatprep.subr.mxu0 0.0
        %858 = vmatpush1.msra.mxu0 0.0
        %859 = vmatprep.subr.mxu0 %v827
        %860 = vmatpush1.msra.mxu0 %v825
        %861 = vmatprep.subr.mxu0 0.0
        %862 = vmatpush2.msra.mxu0 0.0
        %863 = vmatprep.subr.mxu0 0.0
        %864 = vmatpush2.msra.mxu0 0.0
        %865 = vmatprep.subr.mxu0 0.0
        %866 = vmatpush2.msra.mxu0 0.0
        %867 = vmatprep.subr.mxu0 0.0
        %868 = vmatpush2.msra.mxu0 0.0
        %869 = vmatprep.subr.mxu0 0.0
        %870 = vmatpush2.msra.mxu0 0.0
        %871 = vmatprep.subr.mxu0 0.0
        %872 = vmatpush2.msra.mxu0 0.0
        %873 = vmatprep.subr.mxu0 0.0
        %874 = vmatpush2.msra.mxu0 0.0
        %875 = vmatprep.subr.mxu0 0.0
        %876 = vmatpush2.msra.mxu0 0.0
        %877 = vmatprep.subr.mxu0 0.0
        %878 = vmatpush2.msra.mxu0 0.0
        %879 = vmatprep.subr.mxu0 0.0
        %880 = vmatpush2.msra.mxu0 0.0
        %881 = vmatprep.subr.mxu0 0.0
        %882 = vmatpush2.msra.mxu0 0.0
        %883 = vmatprep.subr.mxu0 0.0
        %884 = vmatpush2.msra.mxu0 0.0
        %885 = vmatprep.subr.mxu0 0.0
        %886 = vmatpush2.msra.mxu0 0.0
        %887 = vmatprep.subr.mxu0 0.0
        %888 = vmatpush2.msra.mxu0 0.0
        %889 = vmatprep.subr.mxu0 0.0
        %890 = vmatpush2.msra.mxu0 0.0
        %891 = vmatprep.subr.mxu0 0.0
        %892 = vmatpush2.msra.mxu0 0.0
        %893 = vmatprep.mubr.f32.mxu0 0.0
        %894 = vmatmul.mubr.f32.gmra.mxu0 %v823
        %v895 = vpop.f32.mrf.mxu0
        %v896 = vadd.f32 0.0, %v895
        %v897 = vpop.f32.mrf.mxu0
        %v898 = vadd.f32 0.0, %v897
        %899 = vdwg.mxu0
        %v900 = vadd.f32 %v796, %v896
        %v901 = vadd.f32 %v797, %v898
        %v902 = vld [vmem:[#allocation2 + $0x4] sm:$0xff]
        %v903 = vld [vmem:[#allocation2 + $0xc] sm:$0xf]
        %904 = vrot.lane.b32.xlu0 %v296, 15
        %v905 = vpop.permute.xlu0 %904
        %v906 = vrot.slane %v905, 4
        %v907 = vsel %vm524, %v906, %v905
        %v910 = vmul.f32 %v902, %v907
        %v911 = vmul.f32 %v903, %v906
        %v912 = vld [vmem:[#allocation4] sm:$0xff]
        %914 = vrot.lane.b32.xlu0 %v912, 104
        %v915 = vpop.permute.xlu0 %914
        %v918 = vcombine.high %v910, %v910
        %919 = vrot.lane.b32.xlu0 %v910, 113
        %v920 = vpop.permute.xlu0 %919
        %921 = vrot.lane.b32.xlu0 %v918, 113
        %v922 = vpop.permute.xlu0 %921
        %923 = vrot.lane.b32.xlu0 %v911, 113
        %v924 = vpop.permute.xlu0 %923
        %v925 = vsel %vm505, %v920, %v922
        %v926 = vsel %vm505, %v922, %v924
        %v927 = vsel %vm322, %v915, 0
        %v929 = vsel %vm325, %v925, 0
        %v931 = vsel %vm325, %v926, 0
        %933 = vmatprep.subr.mxu0 0.0
        %934 = vmatpush1.msra.mxu0 0.0
        %935 = vmatprep.subr.mxu0 0.0
        %936 = vmatpush1.msra.mxu0 0.0
        %937 = vmatprep.subr.mxu0 0.0
        %938 = vmatpush1.msra.mxu0 0.0
        %939 = vmatprep.subr.mxu0 0.0
        %940 = vmatpush1.msra.mxu0 0.0
        %941 = vmatprep.subr.mxu0 0.0
        %942 = vmatpush1.msra.mxu0 0.0
        %943 = vmatprep.subr.mxu0 0.0
        %944 = vmatpush1.msra.mxu0 0.0
        %945 = vmatprep.subr.mxu0 0.0
        %946 = vmatpush1.msra.mxu0 0.0
        %947 = vmatprep.subr.mxu0 0.0
        %948 = vmatpush1.msra.mxu0 0.0
        %949 = vmatprep.subr.mxu0 0.0
        %950 = vmatpush1.msra.mxu0 0.0
        %951 = vmatprep.subr.mxu0 0.0
        %952 = vmatpush1.msra.mxu0 0.0
        %953 = vmatprep.subr.mxu0 0.0
        %954 = vmatpush1.msra.mxu0 0.0
        %955 = vmatprep.subr.mxu0 0.0
        %956 = vmatpush1.msra.mxu0 0.0
        %957 = vmatprep.subr.mxu0 0.0
        %958 = vmatpush1.msra.mxu0 0.0
        %959 = vmatprep.subr.mxu0 0.0
        %960 = vmatpush1.msra.mxu0 0.0
        %961 = vmatprep.subr.mxu0 0.0
        %962 = vmatpush1.msra.mxu0 0.0
        %963 = vmatprep.subr.mxu0 %v931
        %964 = vmatpush1.msra.mxu0 %v929
        %965 = vmatprep.subr.mxu0 0.0
        %966 = vmatpush2.msra.mxu0 0.0
        %967 = vmatprep.subr.mxu0 0.0
        %968 = vmatpush2.msra.mxu0 0.0
        %969 = vmatprep.subr.mxu0 0.0
        %970 = vmatpush2.msra.mxu0 0.0
        %971 = vmatprep.subr.mxu0 0.0
        %972 = vmatpush2.msra.mxu0 0.0
        %973 = vmatprep.subr.mxu0 0.0
        %974 = vmatpush2.msra.mxu0 0.0
        %975 = vmatprep.subr.mxu0 0.0
        %976 = vmatpush2.msra.mxu0 0.0
        %977 = vmatprep.subr.mxu0 0.0
        %978 = vmatpush2.msra.mxu0 0.0
        %979 = vmatprep.subr.mxu0 0.0
        %980 = vmatpush2.msra.mxu0 0.0
        %981 = vmatprep.subr.mxu0 0.0
        %982 = vmatpush2.msra.mxu0 0.0
        %983 = vmatprep.subr.mxu0 0.0
        %984 = vmatpush2.msra.mxu0 0.0
        %985 = vmatprep.subr.mxu0 0.0
        %986 = vmatpush2.msra.mxu0 0.0
        %987 = vmatprep.subr.mxu0 0.0
        %988 = vmatpush2.msra.mxu0 0.0
        %989 = vmatprep.subr.mxu0 0.0
        %990 = vmatpush2.msra.mxu0 0.0
        %991 = vmatprep.subr.mxu0 0.0
        %992 = vmatpush2.msra.mxu0 0.0
        %993 = vmatprep.subr.mxu0 0.0
        %994 = vmatpush2.msra.mxu0 0.0
        %995 = vmatprep.subr.mxu0 0.0
        %996 = vmatpush2.msra.mxu0 0.0
        %997 = vmatprep.mubr.f32.mxu0 0.0
        %998 = vmatmul.mubr.f32.gmra.mxu0 %v927
        %v999 = vpop.f32.mrf.mxu0
        %v1000 = vadd.f32 0.0, %v999
        %v1001 = vpop.f32.mrf.mxu0
        %v1002 = vadd.f32 0.0, %v1001
        %1003 = vdwg.mxu0
        %v1004 = vadd.f32 %v900, %v1000
        %v1005 = vadd.f32 %v901, %v1002
        %v1006 = vld [vmem:[#allocation2 + $0x4] sm:$0xff]
        %v1007 = vld [vmem:[#allocation2 + $0xc] sm:$0xf]
        %v1008 = vld [vmem:[#allocation4] sm:$0xff]
        %1010 = vrot.lane.b32.xlu0 %v1008, 100
        %v1011 = vpop.permute.xlu0 %1010
        %v1014 = vcombine.high %v1006, %v1006
        %1015 = vrot.lane.b32.xlu0 %v1006, 112
        %v1016 = vpop.permute.xlu0 %1015
        %1017 = vrot.lane.b32.xlu0 %v1014, 112
        %v1018 = vpop.permute.xlu0 %1017
        %1019 = vrot.lane.b32.xlu0 %v1007, 112
        %v1020 = vpop.permute.xlu0 %1019
        %vm1021 = vcmask 916480
        %v1022 = vsel %vm1021, %v1016, %v1018
        %v1023 = vsel %vm1021, %v1018, %v1020
        %v1024 = vsel %vm322, %v1011, 0
        %v1026 = vsel %vm325, %v1022, 0
        %v1028 = vsel %vm325, %v1023, 0
        %1030 = vmatprep.subr.mxu0 0.0
        %1031 = vmatpush1.msra.mxu0 0.0
        %1032 = vmatprep.subr.mxu0 0.0
        %1033 = vmatpush1.msra.mxu0 0.0
        %1034 = vmatprep.subr.mxu0 0.0
        %1035 = vmatpush1.msra.mxu0 0.0
        %1036 = vmatprep.subr.mxu0 0.0
        %1037 = vmatpush1.msra.mxu0 0.0
        %1038 = vmatprep.subr.mxu0 0.0
        %1039 = vmatpush1.msra.mxu0 0.0
        %1040 = vmatprep.subr.mxu0 0.0
        %1041 = vmatpush1.msra.mxu0 0.0
        %1042 = vmatprep.subr.mxu0 0.0
        %1043 = vmatpush1.msra.mxu0 0.0
        %1044 = vmatprep.subr.mxu0 0.0
        %1045 = vmatpush1.msra.mxu0 0.0
        %1046 = vmatprep.subr.mxu0 0.0
        %1047 = vmatpush1.msra.mxu0 0.0
        %1048 = vmatprep.subr.mxu0 0.0
        %1049 = vmatpush1.msra.mxu0 0.0
        %1050 = vmatprep.subr.mxu0 0.0
        %1051 = vmatpush1.msra.mxu0 0.0
        %1052 = vmatprep.subr.mxu0 0.0
        %1053 = vmatpush1.msra.mxu0 0.0
        %1054 = vmatprep.subr.mxu0 0.0
        %1055 = vmatpush1.msra.mxu0 0.0
        %1056 = vmatprep.subr.mxu0 0.0
        %1057 = vmatpush1.msra.mxu0 0.0
        %1058 = vmatprep.subr.mxu0 0.0
        %1059 = vmatpush1.msra.mxu0 0.0
        %1060 = vmatprep.subr.mxu0 %v1028
        %1061 = vmatpush1.msra.mxu0 %v1026
        %1062 = vmatprep.subr.mxu0 0.0
        %1063 = vmatpush2.msra.mxu0 0.0
        %1064 = vmatprep.subr.mxu0 0.0
        %1065 = vmatpush2.msra.mxu0 0.0
        %1066 = vmatprep.subr.mxu0 0.0
        %1067 = vmatpush2.msra.mxu0 0.0
        %1068 = vmatprep.subr.mxu0 0.0
        %1069 = vmatpush2.msra.mxu0 0.0
        %1070 = vmatprep.subr.mxu0 0.0
        %1071 = vmatpush2.msra.mxu0 0.0
        %1072 = vmatprep.subr.mxu0 0.0
        %1073 = vmatpush2.msra.mxu0 0.0
        %1074 = vmatprep.subr.mxu0 0.0
        %1075 = vmatpush2.msra.mxu0 0.0
        %1076 = vmatprep.subr.mxu0 0.0
        %1077 = vmatpush2.msra.mxu0 0.0
        %1078 = vmatprep.subr.mxu0 0.0
        %1079 = vmatpush2.msra.mxu0 0.0
        %1080 = vmatprep.subr.mxu0 0.0
        %1081 = vmatpush2.msra.mxu0 0.0
        %1082 = vmatprep.subr.mxu0 0.0
        %1083 = vmatpush2.msra.mxu0 0.0
        %1084 = vmatprep.subr.mxu0 0.0
        %1085 = vmatpush2.msra.mxu0 0.0
        %1086 = vmatprep.subr.mxu0 0.0
        %1087 = vmatpush2.msra.mxu0 0.0
        %1088 = vmatprep.subr.mxu0 0.0
        %1089 = vmatpush2.msra.mxu0 0.0
        %1090 = vmatprep.subr.mxu0 0.0
        %1091 = vmatpush2.msra.mxu0 0.0
        %1092 = vmatprep.subr.mxu0 0.0
        %1093 = vmatpush2.msra.mxu0 0.0
        %1094 = vmatprep.mubr.f32.mxu0 0.0
        %1095 = vmatmul.mubr.f32.gmra.mxu0 %v1024
        %v1096 = vpop.f32.mrf.mxu0
        %v1097 = vadd.f32 0.0, %v1096
        %v1098 = vpop.f32.mrf.mxu0
        %v1099 = vadd.f32 0.0, %v1098
        %1100 = vdwg.mxu0
        %v1101 = vadd.f32 %v1004, %v1097
        %v1102 = vadd.f32 %v1005, %v1099
        %v1103 = vld [vmem:[#allocation2 + $0x4] sm:$0xff]
        %v1104 = vld [vmem:[#allocation2 + $0xc] sm:$0xf]
        %1105 = vrot.lane.b32.xlu0 %v501, 17
        %v1106 = vpop.permute.xlu0 %1105
        %v1107 = vrot.slane %v1106, 4
        %v1108 = vsel %vm410, %v1107, %v1106
        %v1111 = vmul.f32 %v1103, %v1108
        %v1112 = vmul.f32 %v1104, %v1107
        %v1113 = vld [vmem:[#allocation4] sm:$0xff]
        %1115 = vrot.lane.b32.xlu0 %v1113, 96
        %v1116 = vpop.permute.xlu0 %1115
        %v1119 = vcombine.high %v1111, %v1111
        %1120 = vrot.lane.b32.xlu0 %v1111, 111
        %v1121 = vpop.permute.xlu0 %1120
        %1122 = vrot.lane.b32.xlu0 %v1119, 111
        %v1123 = vpop.permute.xlu0 %1122
        %1124 = vrot.lane.b32.xlu0 %v1112, 111
        %v1125 = vpop.permute.xlu0 %1124
        %v1126 = vsel %vm300, %v1121, %v1123
        %v1127 = vsel %vm300, %v1123, %v1125
        %v1128 = vsel %vm322, %v1116, 0
        %v1130 = vsel %vm325, %v1126, 0
        %v1132 = vsel %vm325, %v1127, 0
        %1134 = vmatprep.subr.mxu0 0.0
        %1135 = vmatpush1.msra.mxu0 0.0
        %1136 = vmatprep.subr.mxu0 0.0
        %1137 = vmatpush1.msra.mxu0 0.0
        %1138 = vmatprep.subr.mxu0 0.0
        %1139 = vmatpush1.msra.mxu0 0.0
        %1140 = vmatprep.subr.mxu0 0.0
        %1141 = vmatpush1.msra.mxu0 0.0
        %1142 = vmatprep.subr.mxu0 0.0
        %1143 = vmatpush1.msra.mxu0 0.0
        %1144 = vmatprep.subr.mxu0 0.0
        %1145 = vmatpush1.msra.mxu0 0.0
        %1146 = vmatprep.subr.mxu0 0.0
        %1147 = vmatpush1.msra.mxu0 0.0
        %1148 = vmatprep.subr.mxu0 0.0
        %1149 = vmatpush1.msra.mxu0 0.0
        %1150 = vmatprep.subr.mxu0 0.0
        %1151 = vmatpush1.msra.mxu0 0.0
        %1152 = vmatprep.subr.mxu0 0.0
        %1153 = vmatpush1.msra.mxu0 0.0
        %1154 = vmatprep.subr.mxu0 0.0
        %1155 = vmatpush1.msra.mxu0 0.0
        %1156 = vmatprep.subr.mxu0 0.0
        %1157 = vmatpush1.msra.mxu0 0.0
        %1158 = vmatprep.subr.mxu0 0.0
        %1159 = vmatpush1.msra.mxu0 0.0
        %1160 = vmatprep.subr.mxu0 0.0
        %1161 = vmatpush1.msra.mxu0 0.0
        %1162 = vmatprep.subr.mxu0 0.0
        %1163 = vmatpush1.msra.mxu0 0.0
        %1164 = vmatprep.subr.mxu0 %v1132
        %1165 = vmatpush1.msra.mxu0 %v1130
        %1166 = vmatprep.subr.mxu0 0.0
        %1167 = vmatpush2.msra.mxu0 0.0
        %1168 = vmatprep.subr.mxu0 0.0
        %1169 = vmatpush2.msra.mxu0 0.0
        %1170 = vmatprep.subr.mxu0 0.0
        %1171 = vmatpush2.msra.mxu0 0.0
        %1172 = vmatprep.subr.mxu0 0.0
        %1173 = vmatpush2.msra.mxu0 0.0
        %1174 = vmatprep.subr.mxu0 0.0
        %1175 = vmatpush2.msra.mxu0 0.0
        %1176 = vmatprep.subr.mxu0 0.0
        %1177 = vmatpush2.msra.mxu0 0.0
        %1178 = vmatprep.subr.mxu0 0.0
        %1179 = vmatpush2.msra.mxu0 0.0
        %1180 = vmatprep.subr.mxu0 0.0
        %1181 = vmatpush2.msra.mxu0 0.0
        %1182 = vmatprep.subr.mxu0 0.0
        %1183 = vmatpush2.msra.mxu0 0.0
        %1184 = vmatprep.subr.mxu0 0.0
        %1185 = vmatpush2.msra.mxu0 0.0
        %1186 = vmatprep.subr.mxu0 0.0
        %1187 = vmatpush2.msra.mxu0 0.0
        %1188 = vmatprep.subr.mxu0 0.0
        %1189 = vmatpush2.msra.mxu0 0.0
        %1190 = vmatprep.subr.mxu0 0.0
        %1191 = vmatpush2.msra.mxu0 0.0
        %1192 = vmatprep.subr.mxu0 0.0
        %1193 = vmatpush2.msra.mxu0 0.0
        %1194 = vmatprep.subr.mxu0 0.0
        %1195 = vmatpush2.msra.mxu0 0.0
        %1196 = vmatprep.subr.mxu0 0.0
        %1197 = vmatpush2.msra.mxu0 0.0
        %1198 = vmatprep.mubr.f32.mxu0 0.0
        %1199 = vmatmul.mubr.f32.gmra.mxu0 %v1128
        %v1200 = vpop.f32.mrf.mxu0
        %v1201 = vadd.f32 0.0, %v1200
        %v1202 = vpop.f32.mrf.mxu0
        %v1203 = vadd.f32 0.0, %v1202
        %1204 = vdwg.mxu0
        %v1205 = vadd.f32 %v1101, %v1201
        %v1206 = vadd.f32 %v1102, %v1203
        %v1207 = vld [vmem:[%s2] sm:$0xff]
        %1209 = vset.pattern.permute.xlu0 0
        %1210 = vperm.xlu0 %1209, %v1207
        %v1211 = vpop.permute.xlu0 %1210
        %v1213 = vadd.f32 %v1205, %v1211
        %v1214 = vadd.f32 %v1206, %v1211
        %v1215 = vmax.f32 %v1213, 0.0
        %v1216 = vmax.f32 %v1214, 0.0
        %1217 = vst [vmem:[#allocation3 + $0x8] sm:$0xff] %v1215
        %1218 = vst [vmem:[#allocation3 + $0x10] sm:$0xff] %v1216
        %v1219 = vld [vmem:[#allocation3] sm:$0xff]
        %v1220 = vld [vmem:[#allocation3 + $0x8] sm:$0xff]
        %v1221 = vld [vmem:[#allocation3 + $0x10] sm:$0xff]
        %1222 = vrot.lane.b32.xlu0 %v291, 111
        %v1223 = vpop.permute.xlu0 %1222
        %1224 = vrot.lane.b32.xlu0 %v295, 111
        %v1225 = vpop.permute.xlu0 %1224
        %v1226 = vsel %vm300, %v1223, %v1225
        %v1230 = vmul.f32 %v1219, %v1223
        %v1231 = vmul.f32 %v1220, %v1226
        %v1232 = vmul.f32 %v1221, %v1225
        %v1233 = vld [vmem:[#allocation7] sm:$0xff]
        %1235 = vrot.lane.b32.xlu0 %v1233, 120
        %v1236 = vpop.permute.xlu0 %1235
        %1240 = vrot.lane.b32.xlu0 %v1219, 16
        %v1241 = vpop.permute.xlu0 %1240
        %1242 = vrot.lane.b32.xlu0 %v1220, 16
        %v1243 = vpop.permute.xlu0 %1242
        %1244 = vrot.lane.b32.xlu0 %v1221, 16
        %v1245 = vpop.permute.xlu0 %1244
        %v1246 = vsel %vm319, %v1241, %v1243
        %v1247 = vsel %vm319, %v1243, %v1245
        %vm1250 = vcmask 64512
        %v1251 = vsel %vm1250, %v1236, 0
        %1253 = vmatprep.subr.mxu0 0.0
        %1254 = vmatpush1.msra.mxu0 0.0
        %1255 = vmatprep.subr.mxu0 0.0
        %1256 = vmatpush1.msra.mxu0 0.0
        %1257 = vmatprep.subr.mxu0 0.0
        %1258 = vmatpush1.msra.mxu0 0.0
        %1259 = vmatprep.subr.mxu0 0.0
        %1260 = vmatpush1.msra.mxu0 0.0
        %1261 = vmatprep.subr.mxu0 0.0
        %1262 = vmatpush1.msra.mxu0 0.0
        %1263 = vmatprep.subr.mxu0 0.0
        %1264 = vmatpush1.msra.mxu0 0.0
        %1265 = vmatprep.subr.mxu0 0.0
        %1266 = vmatpush1.msra.mxu0 0.0
        %1267 = vmatprep.subr.mxu0 0.0
        %1268 = vmatpush1.msra.mxu0 0.0
        %1269 = vmatprep.subr.mxu0 0.0
        %1270 = vmatpush1.msra.mxu0 0.0
        %1271 = vmatprep.subr.mxu0 0.0
        %1272 = vmatpush1.msra.mxu0 0.0
        %1273 = vmatprep.subr.mxu0 0.0
        %1274 = vmatpush1.msra.mxu0 0.0
        %1275 = vmatprep.subr.mxu0 0.0
        %1276 = vmatpush1.msra.mxu0 0.0
        %1277 = vmatprep.subr.mxu0 0.0
        %1278 = vmatpush1.msra.mxu0 0.0
        %1279 = vmatprep.subr.mxu0 0.0
        %1280 = vmatpush1.msra.mxu0 0.0
        %1281 = vmatprep.subr.mxu0 0.0
        %1282 = vmatpush1.msra.mxu0 0.0
        %1283 = vmatprep.subr.mxu0 %v1247
        %1284 = vmatpush1.msra.mxu0 %v1246
        %1285 = vmatprep.subr.mxu0 0.0
        %1286 = vmatpush2.msra.mxu0 0.0
        %1287 = vmatprep.subr.mxu0 0.0
        %1288 = vmatpush2.msra.mxu0 0.0
        %1289 = vmatprep.subr.mxu0 0.0
        %1290 = vmatpush2.msra.mxu0 0.0
        %1291 = vmatprep.subr.mxu0 0.0
        %1292 = vmatpush2.msra.mxu0 0.0
        %1293 = vmatprep.subr.mxu0 0.0
        %1294 = vmatpush2.msra.mxu0 0.0
        %1295 = vmatprep.subr.mxu0 0.0
        %1296 = vmatpush2.msra.mxu0 0.0
        %1297 = vmatprep.subr.mxu0 0.0
        %1298 = vmatpush2.msra.mxu0 0.0
        %1299 = vmatprep.subr.mxu0 0.0
        %1300 = vmatpush2.msra.mxu0 0.0
        %1301 = vmatprep.subr.mxu0 0.0
        %1302 = vmatpush2.msra.mxu0 0.0
        %1303 = vmatprep.subr.mxu0 0.0
        %1304 = vmatpush2.msra.mxu0 0.0
        %1305 = vmatprep.subr.mxu0 0.0
        %1306 = vmatpush2.msra.mxu0 0.0
        %1307 = vmatprep.subr.mxu0 0.0
        %1308 = vmatpush2.msra.mxu0 0.0
        %1309 = vmatprep.subr.mxu0 0.0
        %1310 = vmatpush2.msra.mxu0 0.0
        %1311 = vmatprep.subr.mxu0 0.0
        %1312 = vmatpush2.msra.mxu0 0.0
        %1313 = vmatprep.subr.mxu0 0.0
        %1314 = vmatpush2.msra.mxu0 0.0
        %1315 = vmatprep.subr.mxu0 0.0
        %1316 = vmatpush2.msra.mxu0 0.0
        %1317 = vmatprep.mubr.f32.mxu0 0.0
        %1318 = vmatmul.mubr.f32.gmra.mxu0 %v1251
        %v1319 = vpop.f32.mrf.mxu0
        %v1320 = vadd.f32 0.0, %v1319
        %v1321 = vpop.f32.mrf.mxu0
        %v1322 = vadd.f32 0.0, %v1321
        %1323 = vdwg.mxu0
        %1327 = vrot.lane.b32.xlu0 %v1230, 17
        %v1328 = vpop.permute.xlu0 %1327
        %1329 = vrot.lane.b32.xlu0 %v1231, 17
        %v1330 = vpop.permute.xlu0 %1329
        %1331 = vrot.lane.b32.xlu0 %v1232, 17
        %v1332 = vpop.permute.xlu0 %1331
        %v1333 = vsel %vm410, %v1328, %v1330
        %v1334 = vsel %vm410, %v1330, %v1332
        %v1337 = vsel %vm1250, %v1233, 0
        %1339 = vmatprep.subr.mxu0 0.0
        %1340 = vmatpush1.msra.mxu0 0.0
        %1341 = vmatprep.subr.mxu0 0.0
        %1342 = vmatpush1.msra.mxu0 0.0
        %1343 = vmatprep.subr.mxu0 0.0
        %1344 = vmatpush1.msra.mxu0 0.0
        %1345 = vmatprep.subr.mxu0 0.0
        %1346 = vmatpush1.msra.mxu0 0.0
        %1347 = vmatprep.subr.mxu0 0.0
        %1348 = vmatpush1.msra.mxu0 0.0
        %1349 = vmatprep.subr.mxu0 0.0
        %1350 = vmatpush1.msra.mxu0 0.0
        %1351 = vmatprep.subr.mxu0 0.0
        %1352 = vmatpush1.msra.mxu0 0.0
        %1353 = vmatprep.subr.mxu0 0.0
        %1354 = vmatpush1.msra.mxu0 0.0
        %1355 = vmatprep.subr.mxu0 0.0
        %1356 = vmatpush1.msra.mxu0 0.0
        %1357 = vmatprep.subr.mxu0 0.0
        %1358 = vmatpush1.msra.mxu0 0.0
        %1359 = vmatprep.subr.mxu0 0.0
        %1360 = vmatpush1.msra.mxu0 0.0
        %1361 = vmatprep.subr.mxu0 0.0
        %1362 = vmatpush1.msra.mxu0 0.0
        %1363 = vmatprep.subr.mxu0 0.0
        %1364 = vmatpush1.msra.mxu0 0.0
        %1365 = vmatprep.subr.mxu0 0.0
        %1366 = vmatpush1.msra.mxu0 0.0
        %1367 = vmatprep.subr.mxu0 0.0
        %1368 = vmatpush1.msra.mxu0 0.0
        %1369 = vmatprep.subr.mxu0 %v1334
        %1370 = vmatpush1.msra.mxu0 %v1333
        %1371 = vmatprep.subr.mxu0 0.0
        %1372 = vmatpush2.msra.mxu0 0.0
        %1373 = vmatprep.subr.mxu0 0.0
        %1374 = vmatpush2.msra.mxu0 0.0
        %1375 = vmatprep.subr.mxu0 0.0
        %1376 = vmatpush2.msra.mxu0 0.0
        %1377 = vmatprep.subr.mxu0 0.0
        %1378 = vmatpush2.msra.mxu0 0.0
        %1379 = vmatprep.subr.mxu0 0.0
        %1380 = vmatpush2.msra.mxu0 0.0
        %1381 = vmatprep.subr.mxu0 0.0
        %1382 = vmatpush2.msra.mxu0 0.0
        %1383 = vmatprep.subr.mxu0 0.0
        %1384 = vmatpush2.msra.mxu0 0.0
        %1385 = vmatprep.subr.mxu0 0.0
        %1386 = vmatpush2.msra.mxu0 0.0
        %1387 = vmatprep.subr.mxu0 0.0
        %1388 = vmatpush2.msra.mxu0 0.0
        %1389 = vmatprep.subr.mxu0 0.0
        %1390 = vmatpush2.msra.mxu0 0.0
        %1391 = vmatprep.subr.mxu0 0.0
        %1392 = vmatpush2.msra.mxu0 0.0
        %1393 = vmatprep.subr.mxu0 0.0
        %1394 = vmatpush2.msra.mxu0 0.0
        %1395 = vmatprep.subr.mxu0 0.0
        %1396 = vmatpush2.msra.mxu0 0.0
        %1397 = vmatprep.subr.mxu0 0.0
        %1398 = vmatpush2.msra.mxu0 0.0
        %1399 = vmatprep.subr.mxu0 0.0
        %1400 = vmatpush2.msra.mxu0 0.0
        %1401 = vmatprep.subr.mxu0 0.0
        %1402 = vmatpush2.msra.mxu0 0.0
        %1403 = vmatprep.mubr.f32.mxu0 0.0
        %1404 = vmatmul.mubr.f32.gmra.mxu0 %v1337
        %v1405 = vpop.f32.mrf.mxu0
        %v1406 = vadd.f32 %v1320, %v1405
        %v1407 = vpop.f32.mrf.mxu0
        %v1408 = vadd.f32 %v1322, %v1407
        %1409 = vdwg.mxu0
        %1410 = vrot.lane.b32.xlu0 %v496, 113
        %v1411 = vpop.permute.xlu0 %1410
        %1412 = vrot.lane.b32.xlu0 %v500, 113
        %v1413 = vpop.permute.xlu0 %1412
        %v1414 = vsel %vm505, %v1411, %v1413
        %v1418 = vmul.f32 %v1219, %v1411
        %v1419 = vmul.f32 %v1220, %v1414
        %v1420 = vmul.f32 %v1221, %v1413
        %1421 = vrot.lane.b32.xlu0 %v1233, 112
        %v1422 = vpop.permute.xlu0 %1421
        %1426 = vrot.lane.b32.xlu0 %v1418, 15
        %v1427 = vpop.permute.xlu0 %1426
        %1428 = vrot.lane.b32.xlu0 %v1419, 15
        %v1429 = vpop.permute.xlu0 %1428
        %1430 = vrot.lane.b32.xlu0 %v1420, 15
        %v1431 = vpop.permute.xlu0 %1430
        %v1432 = vsel %vm524, %v1427, %v1429
        %v1433 = vsel %vm524, %v1429, %v1431
        %v1436 = vsel %vm1250, %v1422, 0
        %1438 = vmatprep.subr.mxu0 0.0
        %1439 = vmatpush1.msra.mxu0 0.0
        %1440 = vmatprep.subr.mxu0 0.0
        %1441 = vmatpush1.msra.mxu0 0.0
        %1442 = vmatprep.subr.mxu0 0.0
        %1443 = vmatpush1.msra.mxu0 0.0
        %1444 = vmatprep.subr.mxu0 0.0
        %1445 = vmatpush1.msra.mxu0 0.0
        %1446 = vmatprep.subr.mxu0 0.0
        %1447 = vmatpush1.msra.mxu0 0.0
        %1448 = vmatprep.subr.mxu0 0.0
        %1449 = vmatpush1.msra.mxu0 0.0
        %1450 = vmatprep.subr.mxu0 0.0
        %1451 = vmatpush1.msra.mxu0 0.0
        %1452 = vmatprep.subr.mxu0 0.0
        %1453 = vmatpush1.msra.mxu0 0.0
        %1454 = vmatprep.subr.mxu0 0.0
        %1455 = vmatpush1.msra.mxu0 0.0
        %1456 = vmatprep.subr.mxu0 0.0
        %1457 = vmatpush1.msra.mxu0 0.0
        %1458 = vmatprep.subr.mxu0 0.0
        %1459 = vmatpush1.msra.mxu0 0.0
        %1460 = vmatprep.subr.mxu0 0.0
        %1461 = vmatpush1.msra.mxu0 0.0
        %1462 = vmatprep.subr.mxu0 0.0
        %1463 = vmatpush1.msra.mxu0 0.0
        %1464 = vmatprep.subr.mxu0 0.0
        %1465 = vmatpush1.msra.mxu0 0.0
        %1466 = vmatprep.subr.mxu0 0.0
        %1467 = vmatpush1.msra.mxu0 0.0
        %1468 = vmatprep.subr.mxu0 %v1433
        %1469 = vmatpush1.msra.mxu0 %v1432
        %1470 = vmatprep.subr.mxu0 0.0
        %1471 = vmatpush2.msra.mxu0 0.0
        %1472 = vmatprep.subr.mxu0 0.0
        %1473 = vmatpush2.msra.mxu0 0.0
        %1474 = vmatprep.subr.mxu0 0.0
        %1475 = vmatpush2.msra.mxu0 0.0
        %1476 = vmatprep.subr.mxu0 0.0
        %1477 = vmatpush2.msra.mxu0 0.0
        %1478 = vmatprep.subr.mxu0 0.0
        %1479 = vmatpush2.msra.mxu0 0.0
        %1480 = vmatprep.subr.mxu0 0.0
        %1481 = vmatpush2.msra.mxu0 0.0
        %1482 = vmatprep.subr.mxu0 0.0
        %1483 = vmatpush2.msra.mxu0 0.0
        %1484 = vmatprep.subr.mxu0 0.0
        %1485 = vmatpush2.msra.mxu0 0.0
        %1486 = vmatprep.subr.mxu0 0.0
        %1487 = vmatpush2.msra.mxu0 0.0
        %1488 = vmatprep.subr.mxu0 0.0
        %1489 = vmatpush2.msra.mxu0 0.0
        %1490 = vmatprep.subr.mxu0 0.0
        %1491 = vmatpush2.msra.mxu0 0.0
        %1492 = vmatprep.subr.mxu0 0.0
        %1493 = vmatpush2.msra.mxu0 0.0
        %1494 = vmatprep.subr.mxu0 0.0
        %1495 = vmatpush2.msra.mxu0 0.0
        %1496 = vmatprep.subr.mxu0 0.0
        %1497 = vmatpush2.msra.mxu0 0.0
        %1498 = vmatprep.subr.mxu0 0.0
        %1499 = vmatpush2.msra.mxu0 0.0
        %1500 = vmatprep.subr.mxu0 0.0
        %1501 = vmatpush2.msra.mxu0 0.0
        %1502 = vmatprep.mubr.f32.mxu0 0.0
        %1503 = vmatmul.mubr.f32.gmra.mxu0 %v1436
        %v1504 = vpop.f32.mrf.mxu0
        %v1505 = vadd.f32 0.0, %v1504
        %v1506 = vpop.f32.mrf.mxu0
        %v1507 = vadd.f32 0.0, %v1506
        %1508 = vdwg.mxu0
        %v1509 = vadd.f32 %v1406, %v1505
        %v1510 = vadd.f32 %v1408, %v1507
        %1511 = vrot.lane.b32.xlu0 %v291, 127
        %v1512 = vpop.permute.xlu0 %1511
        %1513 = vrot.lane.b32.xlu0 %v295, 127
        %v1514 = vpop.permute.xlu0 %1513
        %v1515 = vsel %vm611, %v1512, %v1514
        %v1519 = vmul.f32 %v1219, %v1512
        %v1520 = vmul.f32 %v1220, %v1515
        %v1521 = vmul.f32 %v1221, %v1514
        %1522 = vrot.lane.b32.xlu0 %v1233, 104
        %v1523 = vpop.permute.xlu0 %1522
        %1527 = vrot.lane.b32.xlu0 %v1519, 1
        %v1528 = vpop.permute.xlu0 %1527
        %1529 = vrot.lane.b32.xlu0 %v1520, 1
        %v1530 = vpop.permute.xlu0 %1529
        %1531 = vrot.lane.b32.xlu0 %v1521, 1
        %v1532 = vpop.permute.xlu0 %1531
        %v1533 = vsel %vm630, %v1528, %v1530
        %v1534 = vsel %vm630, %v1530, %v1532
        %v1537 = vsel %vm1250, %v1523, 0
        %1539 = vmatprep.subr.mxu0 0.0
        %1540 = vmatpush1.msra.mxu0 0.0
        %1541 = vmatprep.subr.mxu0 0.0
        %1542 = vmatpush1.msra.mxu0 0.0
        %1543 = vmatprep.subr.mxu0 0.0
        %1544 = vmatpush1.msra.mxu0 0.0
        %1545 = vmatprep.subr.mxu0 0.0
        %1546 = vmatpush1.msra.mxu0 0.0
        %1547 = vmatprep.subr.mxu0 0.0
        %1548 = vmatpush1.msra.mxu0 0.0
        %1549 = vmatprep.subr.mxu0 0.0
        %1550 = vmatpush1.msra.mxu0 0.0
        %1551 = vmatprep.subr.mxu0 0.0
        %1552 = vmatpush1.msra.mxu0 0.0
        %1553 = vmatprep.subr.mxu0 0.0
        %1554 = vmatpush1.msra.mxu0 0.0
        %1555 = vmatprep.subr.mxu0 0.0
        %1556 = vmatpush1.msra.mxu0 0.0
        %1557 = vmatprep.subr.mxu0 0.0
        %1558 = vmatpush1.msra.mxu0 0.0
        %1559 = vmatprep.subr.mxu0 0.0
        %1560 = vmatpush1.msra.mxu0 0.0
        %1561 = vmatprep.subr.mxu0 0.0
        %1562 = vmatpush1.msra.mxu0 0.0
        %1563 = vmatprep.subr.mxu0 0.0
        %1564 = vmatpush1.msra.mxu0 0.0
        %1565 = vmatprep.subr.mxu0 0.0
        %1566 = vmatpush1.msra.mxu0 0.0
        %1567 = vmatprep.subr.mxu0 0.0
        %1568 = vmatpush1.msra.mxu0 0.0
        %1569 = vmatprep.subr.mxu0 %v1534
        %1570 = vmatpush1.msra.mxu0 %v1533
        %1571 = vmatprep.subr.mxu0 0.0
        %1572 = vmatpush2.msra.mxu0 0.0
        %1573 = vmatprep.subr.mxu0 0.0
        %1574 = vmatpush2.msra.mxu0 0.0
        %1575 = vmatprep.subr.mxu0 0.0
        %1576 = vmatpush2.msra.mxu0 0.0
        %1577 = vmatprep.subr.mxu0 0.0
        %1578 = vmatpush2.msra.mxu0 0.0
        %1579 = vmatprep.subr.mxu0 0.0
        %1580 = vmatpush2.msra.mxu0 0.0
        %1581 = vmatprep.subr.mxu0 0.0
        %1582 = vmatpush2.msra.mxu0 0.0
        %1583 = vmatprep.subr.mxu0 0.0
        %1584 = vmatpush2.msra.mxu0 0.0
        %1585 = vmatprep.subr.mxu0 0.0
        %1586 = vmatpush2.msra.mxu0 0.0
        %1587 = vmatprep.subr.mxu0 0.0
        %1588 = vmatpush2.msra.mxu0 0.0
        %1589 = vmatprep.subr.mxu0 0.0
        %1590 = vmatpush2.msra.mxu0 0.0
        %1591 = vmatprep.subr.mxu0 0.0
        %1592 = vmatpush2.msra.mxu0 0.0
        %1593 = vmatprep.subr.mxu0 0.0
        %1594 = vmatpush2.msra.mxu0 0.0
        %1595 = vmatprep.subr.mxu0 0.0
        %1596 = vmatpush2.msra.mxu0 0.0
        %1597 = vmatprep.subr.mxu0 0.0
        %1598 = vmatpush2.msra.mxu0 0.0
        %1599 = vmatprep.subr.mxu0 0.0
        %1600 = vmatpush2.msra.mxu0 0.0
        %1601 = vmatprep.subr.mxu0 0.0
        %1602 = vmatpush2.msra.mxu0 0.0
        %1603 = vmatprep.mubr.f32.mxu0 0.0
        %1604 = vmatmul.mubr.f32.gmra.mxu0 %v1537
        %v1605 = vpop.f32.mrf.mxu0
        %v1606 = vadd.f32 0.0, %v1605
        %v1607 = vpop.f32.mrf.mxu0
        %v1608 = vadd.f32 0.0, %v1607
        %1609 = vdwg.mxu0
        %v1610 = vadd.f32 %v1509, %v1606
        %v1611 = vadd.f32 %v1510, %v1608
        %1612 = vrot.lane.b32.xlu0 %v1233, 96
        %v1613 = vpop.permute.xlu0 %1612
        %v1614 = vsel %vm1250, %v1613, 0
        %1616 = vmatprep.subr.mxu0 0.0
        %1617 = vmatpush1.msra.mxu0 0.0
        %1618 = vmatprep.subr.mxu0 0.0
        %1619 = vmatpush1.msra.mxu0 0.0
        %1620 = vmatprep.subr.mxu0 0.0
        %1621 = vmatpush1.msra.mxu0 0.0
        %1622 = vmatprep.subr.mxu0 0.0
        %1623 = vmatpush1.msra.mxu0 0.0
        %1624 = vmatprep.subr.mxu0 0.0
        %1625 = vmatpush1.msra.mxu0 0.0
        %1626 = vmatprep.subr.mxu0 0.0
        %1627 = vmatpush1.msra.mxu0 0.0
        %1628 = vmatprep.subr.mxu0 0.0
        %1629 = vmatpush1.msra.mxu0 0.0
        %1630 = vmatprep.subr.mxu0 0.0
        %1631 = vmatpush1.msra.mxu0 0.0
        %1632 = vmatprep.subr.mxu0 0.0
        %1633 = vmatpush1.msra.mxu0 0.0
        %1634 = vmatprep.subr.mxu0 0.0
        %1635 = vmatpush1.msra.mxu0 0.0
        %1636 = vmatprep.subr.mxu0 0.0
        %1637 = vmatpush1.msra.mxu0 0.0
        %1638 = vmatprep.subr.mxu0 0.0
        %1639 = vmatpush1.msra.mxu0 0.0
        %1640 = vmatprep.subr.mxu0 0.0
        %1641 = vmatpush1.msra.mxu0 0.0
        %1642 = vmatprep.subr.mxu0 0.0
        %1643 = vmatpush1.msra.mxu0 0.0
        %1644 = vmatprep.subr.mxu0 0.0
        %1645 = vmatpush1.msra.mxu0 0.0
        %1646 = vmatprep.subr.mxu0 %v1221
        %1647 = vmatpush1.msra.mxu0 %v1220
        %1648 = vmatprep.subr.mxu0 0.0
        %1649 = vmatpush2.msra.mxu0 0.0
        %1650 = vmatprep.subr.mxu0 0.0
        %1651 = vmatpush2.msra.mxu0 0.0
        %1652 = vmatprep.subr.mxu0 0.0
        %1653 = vmatpush2.msra.mxu0 0.0
        %1654 = vmatprep.subr.mxu0 0.0
        %1655 = vmatpush2.msra.mxu0 0.0
        %1656 = vmatprep.subr.mxu0 0.0
        %1657 = vmatpush2.msra.mxu0 0.0
        %1658 = vmatprep.subr.mxu0 0.0
        %1659 = vmatpush2.msra.mxu0 0.0
        %1660 = vmatprep.subr.mxu0 0.0
        %1661 = vmatpush2.msra.mxu0 0.0
        %1662 = vmatprep.subr.mxu0 0.0
        %1663 = vmatpush2.msra.mxu0 0.0
        %1664 = vmatprep.subr.mxu0 0.0
        %1665 = vmatpush2.msra.mxu0 0.0
        %1666 = vmatprep.subr.mxu0 0.0
        %1667 = vmatpush2.msra.mxu0 0.0
        %1668 = vmatprep.subr.mxu0 0.0
        %1669 = vmatpush2.msra.mxu0 0.0
        %1670 = vmatprep.subr.mxu0 0.0
        %1671 = vmatpush2.msra.mxu0 0.0
        %1672 = vmatprep.subr.mxu0 0.0
        %1673 = vmatpush2.msra.mxu0 0.0
        %1674 = vmatprep.subr.mxu0 0.0
        %1675 = vmatpush2.msra.mxu0 0.0
        %1676 = vmatprep.subr.mxu0 0.0
        %1677 = vmatpush2.msra.mxu0 0.0
        %1678 = vmatprep.subr.mxu0 0.0
        %1679 = vmatpush2.msra.mxu0 0.0
        %1680 = vmatprep.mubr.f32.mxu0 0.0
        %1681 = vmatmul.mubr.f32.gmra.mxu0 %v1614
        %v1682 = vpop.f32.mrf.mxu0
        %v1683 = vadd.f32 0.0, %v1682
        %v1684 = vpop.f32.mrf.mxu0
        %v1685 = vadd.f32 0.0, %v1684
        %1686 = vdwg.mxu0
        %v1687 = vadd.f32 %v1610, %v1683
        %v1688 = vadd.f32 %v1611, %v1685
        %v1689 = vld [vmem:[#allocation3 + $0x8] sm:$0xff]
        %v1690 = vld [vmem:[#allocation3 + $0x10] sm:$0xff]
        %v1691 = vld [vmem:[#allocation3 + $0x18] sm:$0xff]
        %1692 = vrot.lane.b32.xlu0 %v496, 1
        %v1693 = vpop.permute.xlu0 %1692
        %1694 = vrot.lane.b32.xlu0 %v500, 1
        %v1695 = vpop.permute.xlu0 %1694
        %v1696 = vsel %vm630, %v1693, %v1695
        %v1700 = vmul.f32 %v1689, %v1693
        %v1701 = vmul.f32 %v1690, %v1696
        %v1702 = vmul.f32 %v1691, %v1695
        %1703 = vrot.lane.b32.xlu0 %v1233, 88
        %v1704 = vpop.permute.xlu0 %1703
        %1708 = vrot.lane.b32.xlu0 %v1700, 127
        %v1709 = vpop.permute.xlu0 %1708
        %1710 = vrot.lane.b32.xlu0 %v1701, 127
        %v1711 = vpop.permute.xlu0 %1710
        %1712 = vrot.lane.b32.xlu0 %v1702, 127
        %v1713 = vpop.permute.xlu0 %1712
        %v1714 = vsel %vm611, %v1709, %v1711
        %v1715 = vsel %vm611, %v1711, %v1713
        %v1718 = vsel %vm1250, %v1704, 0
        %1720 = vmatprep.subr.mxu0 0.0
        %1721 = vmatpush1.msra.mxu0 0.0
        %1722 = vmatprep.subr.mxu0 0.0
        %1723 = vmatpush1.msra.mxu0 0.0
        %1724 = vmatprep.subr.mxu0 0.0
        %1725 = vmatpush1.msra.mxu0 0.0
        %1726 = vmatprep.subr.mxu0 0.0
        %1727 = vmatpush1.msra.mxu0 0.0
        %1728 = vmatprep.subr.mxu0 0.0
        %1729 = vmatpush1.msra.mxu0 0.0
        %1730 = vmatprep.subr.mxu0 0.0
        %1731 = vmatpush1.msra.mxu0 0.0
        %1732 = vmatprep.subr.mxu0 0.0
        %1733 = vmatpush1.msra.mxu0 0.0
        %1734 = vmatprep.subr.mxu0 0.0
        %1735 = vmatpush1.msra.mxu0 0.0
        %1736 = vmatprep.subr.mxu0 0.0
        %1737 = vmatpush1.msra.mxu0 0.0
        %1738 = vmatprep.subr.mxu0 0.0
        %1739 = vmatpush1.msra.mxu0 0.0
        %1740 = vmatprep.subr.mxu0 0.0
        %1741 = vmatpush1.msra.mxu0 0.0
        %1742 = vmatprep.subr.mxu0 0.0
        %1743 = vmatpush1.msra.mxu0 0.0
        %1744 = vmatprep.subr.mxu0 0.0
        %1745 = vmatpush1.msra.mxu0 0.0
        %1746 = vmatprep.subr.mxu0 0.0
        %1747 = vmatpush1.msra.mxu0 0.0
        %1748 = vmatprep.subr.mxu0 0.0
        %1749 = vmatpush1.msra.mxu0 0.0
        %1750 = vmatprep.subr.mxu0 %v1715
        %1751 = vmatpush1.msra.mxu0 %v1714
        %1752 = vmatprep.subr.mxu0 0.0
        %1753 = vmatpush2.msra.mxu0 0.0
        %1754 = vmatprep.subr.mxu0 0.0
        %1755 = vmatpush2.msra.mxu0 0.0
        %1756 = vmatprep.subr.mxu0 0.0
        %1757 = vmatpush2.msra.mxu0 0.0
        %1758 = vmatprep.subr.mxu0 0.0
        %1759 = vmatpush2.msra.mxu0 0.0
        %1760 = vmatprep.subr.mxu0 0.0
        %1761 = vmatpush2.msra.mxu0 0.0
        %1762 = vmatprep.subr.mxu0 0.0
        %1763 = vmatpush2.msra.mxu0 0.0
        %1764 = vmatprep.subr.mxu0 0.0
        %1765 = vmatpush2.msra.mxu0 0.0
        %1766 = vmatprep.subr.mxu0 0.0
        %1767 = vmatpush2.msra.mxu0 0.0
        %1768 = vmatprep.subr.mxu0 0.0
        %1769 = vmatpush2.msra.mxu0 0.0
        %1770 = vmatprep.subr.mxu0 0.0
        %1771 = vmatpush2.msra.mxu0 0.0
        %1772 = vmatprep.subr.mxu0 0.0
        %1773 = vmatpush2.msra.mxu0 0.0
        %1774 = vmatprep.subr.mxu0 0.0
        %1775 = vmatpush2.msra.mxu0 0.0
        %1776 = vmatprep.subr.mxu0 0.0
        %1777 = vmatpush2.msra.mxu0 0.0
        %1778 = vmatprep.subr.mxu0 0.0
        %1779 = vmatpush2.msra.mxu0 0.0
        %1780 = vmatprep.subr.mxu0 0.0
        %1781 = vmatpush2.msra.mxu0 0.0
        %1782 = vmatprep.subr.mxu0 0.0
        %1783 = vmatpush2.msra.mxu0 0.0
        %1784 = vmatprep.mubr.f32.mxu0 0.0
        %1785 = vmatmul.mubr.f32.gmra.mxu0 %v1718
        %v1786 = vpop.f32.mrf.mxu0
        %v1787 = vadd.f32 0.0, %v1786
        %v1788 = vpop.f32.mrf.mxu0
        %v1789 = vadd.f32 0.0, %v1788
        %1790 = vdwg.mxu0
        %v1791 = vadd.f32 %v1687, %v1787
        %v1792 = vadd.f32 %v1688, %v1789
        %1793 = vrot.lane.b32.xlu0 %v291, 15
        %v1794 = vpop.permute.xlu0 %1793
        %1795 = vrot.lane.b32.xlu0 %v295, 15
        %v1796 = vpop.permute.xlu0 %1795
        %v1797 = vsel %vm524, %v1794, %v1796
        %v1801 = vmul.f32 %v1689, %v1794
        %v1802 = vmul.f32 %v1690, %v1797
        %v1803 = vmul.f32 %v1691, %v1796
        %1804 = vrot.lane.b32.xlu0 %v1233, 80
        %v1805 = vpop.permute.xlu0 %1804
        %1809 = vrot.lane.b32.xlu0 %v1801, 113
        %v1810 = vpop.permute.xlu0 %1809
        %1811 = vrot.lane.b32.xlu0 %v1802, 113
        %v1812 = vpop.permute.xlu0 %1811
        %1813 = vrot.lane.b32.xlu0 %v1803, 113
        %v1814 = vpop.permute.xlu0 %1813
        %v1815 = vsel %vm505, %v1810, %v1812
        %v1816 = vsel %vm505, %v1812, %v1814
        %v1819 = vsel %vm1250, %v1805, 0
        %1821 = vmatprep.subr.mxu0 0.0
        %1822 = vmatpush1.msra.mxu0 0.0
        %1823 = vmatprep.subr.mxu0 0.0
        %1824 = vmatpush1.msra.mxu0 0.0
        %1825 = vmatprep.subr.mxu0 0.0
        %1826 = vmatpush1.msra.mxu0 0.0
        %1827 = vmatprep.subr.mxu0 0.0
        %1828 = vmatpush1.msra.mxu0 0.0
        %1829 = vmatprep.subr.mxu0 0.0
        %1830 = vmatpush1.msra.mxu0 0.0
        %1831 = vmatprep.subr.mxu0 0.0
        %1832 = vmatpush1.msra.mxu0 0.0
        %1833 = vmatprep.subr.mxu0 0.0
        %1834 = vmatpush1.msra.mxu0 0.0
        %1835 = vmatprep.subr.mxu0 0.0
        %1836 = vmatpush1.msra.mxu0 0.0
        %1837 = vmatprep.subr.mxu0 0.0
        %1838 = vmatpush1.msra.mxu0 0.0
        %1839 = vmatprep.subr.mxu0 0.0
        %1840 = vmatpush1.msra.mxu0 0.0
        %1841 = vmatprep.subr.mxu0 0.0
        %1842 = vmatpush1.msra.mxu0 0.0
        %1843 = vmatprep.subr.mxu0 0.0
        %1844 = vmatpush1.msra.mxu0 0.0
        %1845 = vmatprep.subr.mxu0 0.0
        %1846 = vmatpush1.msra.mxu0 0.0
        %1847 = vmatprep.subr.mxu0 0.0
        %1848 = vmatpush1.msra.mxu0 0.0
        %1849 = vmatprep.subr.mxu0 0.0
        %1850 = vmatpush1.msra.mxu0 0.0
        %1851 = vmatprep.subr.mxu0 %v1816
        %1852 = vmatpush1.msra.mxu0 %v1815
        %1853 = vmatprep.subr.mxu0 0.0
        %1854 = vmatpush2.msra.mxu0 0.0
        %1855 = vmatprep.subr.mxu0 0.0
        %1856 = vmatpush2.msra.mxu0 0.0
        %1857 = vmatprep.subr.mxu0 0.0
        %1858 = vmatpush2.msra.mxu0 0.0
        %1859 = vmatprep.subr.mxu0 0.0
        %1860 = vmatpush2.msra.mxu0 0.0
        %1861 = vmatprep.subr.mxu0 0.0
        %1862 = vmatpush2.msra.mxu0 0.0
        %1863 = vmatprep.subr.mxu0 0.0
        %1864 = vmatpush2.msra.mxu0 0.0
        %1865 = vmatprep.subr.mxu0 0.0
        %1866 = vmatpush2.msra.mxu0 0.0
        %1867 = vmatprep.subr.mxu0 0.0
        %1868 = vmatpush2.msra.mxu0 0.0
        %1869 = vmatprep.subr.mxu0 0.0
        %1870 = vmatpush2.msra.mxu0 0.0
        %1871 = vmatprep.subr.mxu0 0.0
        %1872 = vmatpush2.msra.mxu0 0.0
        %1873 = vmatprep.subr.mxu0 0.0
        %1874 = vmatpush2.msra.mxu0 0.0
        %1875 = vmatprep.subr.mxu0 0.0
        %1876 = vmatpush2.msra.mxu0 0.0
        %1877 = vmatprep.subr.mxu0 0.0
        %1878 = vmatpush2.msra.mxu0 0.0
        %1879 = vmatprep.subr.mxu0 0.0
        %1880 = vmatpush2.msra.mxu0 0.0
        %1881 = vmatprep.subr.mxu0 0.0
        %1882 = vmatpush2.msra.mxu0 0.0
        %1883 = vmatprep.subr.mxu0 0.0
        %1884 = vmatpush2.msra.mxu0 0.0
        %1885 = vmatprep.mubr.f32.mxu0 0.0
        %1886 = vmatmul.mubr.f32.gmra.mxu0 %v1819
        %v1887 = vpop.f32.mrf.mxu0
        %v1888 = vadd.f32 0.0, %v1887
        %v1889 = vpop.f32.mrf.mxu0
        %v1890 = vadd.f32 0.0, %v1889
        %1891 = vdwg.mxu0
        %v1892 = vadd.f32 %v1791, %v1888
        %v1893 = vadd.f32 %v1792, %v1890
        %1894 = vrot.lane.b32.xlu0 %v1233, 72
        %v1895 = vpop.permute.xlu0 %1894
        %1899 = vrot.lane.b32.xlu0 %v1689, 112
        %v1900 = vpop.permute.xlu0 %1899
        %1901 = vrot.lane.b32.xlu0 %v1690, 112
        %v1902 = vpop.permute.xlu0 %1901
        %1903 = vrot.lane.b32.xlu0 %v1691, 112
        %v1904 = vpop.permute.xlu0 %1903
        %v1905 = vsel %vm1021, %v1900, %v1902
        %v1906 = vsel %vm1021, %v1902, %v1904
        %v1909 = vsel %vm1250, %v1895, 0
        %1911 = vmatprep.subr.mxu0 0.0
        %1912 = vmatpush1.msra.mxu0 0.0
        %1913 = vmatprep.subr.mxu0 0.0
        %1914 = vmatpush1.msra.mxu0 0.0
        %1915 = vmatprep.subr.mxu0 0.0
        %1916 = vmatpush1.msra.mxu0 0.0
        %1917 = vmatprep.subr.mxu0 0.0
        %1918 = vmatpush1.msra.mxu0 0.0
        %1919 = vmatprep.subr.mxu0 0.0
        %1920 = vmatpush1.msra.mxu0 0.0
        %1921 = vmatprep.subr.mxu0 0.0
        %1922 = vmatpush1.msra.mxu0 0.0
        %1923 = vmatprep.subr.mxu0 0.0
        %1924 = vmatpush1.msra.mxu0 0.0
        %1925 = vmatprep.subr.mxu0 0.0
        %1926 = vmatpush1.msra.mxu0 0.0
        %1927 = vmatprep.subr.mxu0 0.0
        %1928 = vmatpush1.msra.mxu0 0.0
        %1929 = vmatprep.subr.mxu0 0.0
        %1930 = vmatpush1.msra.mxu0 0.0
        %1931 = vmatprep.subr.mxu0 0.0
        %1932 = vmatpush1.msra.mxu0 0.0
        %1933 = vmatprep.subr.mxu0 0.0
        %1934 = vmatpush1.msra.mxu0 0.0
        %1935 = vmatprep.subr.mxu0 0.0
        %1936 = vmatpush1.msra.mxu0 0.0
        %1937 = vmatprep.subr.mxu0 0.0
        %1938 = vmatpush1.msra.mxu0 0.0
        %1939 = vmatprep.subr.mxu0 0.0
        %1940 = vmatpush1.msra.mxu0 0.0
        %1941 = vmatprep.subr.mxu0 %v1906
        %1942 = vmatpush1.msra.mxu0 %v1905
        %1943 = vmatprep.subr.mxu0 0.0
        %1944 = vmatpush2.msra.mxu0 0.0
        %1945 = vmatprep.subr.mxu0 0.0
        %1946 = vmatpush2.msra.mxu0 0.0
        %1947 = vmatprep.subr.mxu0 0.0
        %1948 = vmatpush2.msra.mxu0 0.0
        %1949 = vmatprep.subr.mxu0 0.0
        %1950 = vmatpush2.msra.mxu0 0.0
        %1951 = vmatprep.subr.mxu0 0.0
        %1952 = vmatpush2.msra.mxu0 0.0
        %1953 = vmatprep.subr.mxu0 0.0
        %1954 = vmatpush2.msra.mxu0 0.0
        %1955 = vmatprep.subr.mxu0 0.0
        %1956 = vmatpush2.msra.mxu0 0.0
        %1957 = vmatprep.subr.mxu0 0.0
        %1958 = vmatpush2.msra.mxu0 0.0
        %1959 = vmatprep.subr.mxu0 0.0
        %1960 = vmatpush2.msra.mxu0 0.0
        %1961 = vmatprep.subr.mxu0 0.0
        %1962 = vmatpush2.msra.mxu0 0.0
        %1963 = vmatprep.subr.mxu0 0.0
        %1964 = vmatpush2.msra.mxu0 0.0
        %1965 = vmatprep.subr.mxu0 0.0
        %1966 = vmatpush2.msra.mxu0 0.0
        %1967 = vmatprep.subr.mxu0 0.0
        %1968 = vmatpush2.msra.mxu0 0.0
        %1969 = vmatprep.subr.mxu0 0.0
        %1970 = vmatpush2.msra.mxu0 0.0
        %1971 = vmatprep.subr.mxu0 0.0
        %1972 = vmatpush2.msra.mxu0 0.0
        %1973 = vmatprep.subr.mxu0 0.0
        %1974 = vmatpush2.msra.mxu0 0.0
        %1975 = vmatprep.mubr.f32.mxu0 0.0
        %1976 = vmatmul.mubr.f32.gmra.mxu0 %v1909
        %v1977 = vpop.f32.mrf.mxu0
        %v1978 = vadd.f32 0.0, %v1977
        %v1979 = vpop.f32.mrf.mxu0
        %v1980 = vadd.f32 0.0, %v1979
        %1981 = vdwg.mxu0
        %v1982 = vadd.f32 %v1892, %v1978
        %v1983 = vadd.f32 %v1893, %v1980
        %1984 = vrot.lane.b32.xlu0 %v496, 17
        %v1985 = vpop.permute.xlu0 %1984
        %1986 = vrot.lane.b32.xlu0 %v500, 17
        %v1987 = vpop.permute.xlu0 %1986
        %v1988 = vsel %vm410, %v1985, %v1987
        %v1992 = vmul.f32 %v1689, %v1985
        %v1993 = vmul.f32 %v1690, %v1988
        %v1994 = vmul.f32 %v1691, %v1987
        %1995 = vrot.lane.b32.xlu0 %v1233, 64
        %v1996 = vpop.permute.xlu0 %1995
        %2000 = vrot.lane.b32.xlu0 %v1992, 111
        %v2001 = vpop.permute.xlu0 %2000
        %2002 = vrot.lane.b32.xlu0 %v1993, 111
        %v2003 = vpop.permute.xlu0 %2002
        %2004 = vrot.lane.b32.xlu0 %v1994, 111
        %v2005 = vpop.permute.xlu0 %2004
        %v2006 = vsel %vm300, %v2001, %v2003
        %v2007 = vsel %vm300, %v2003, %v2005
        %v2010 = vsel %vm1250, %v1996, 0
        %2012 = vmatprep.subr.mxu0 0.0
        %2013 = vmatpush1.msra.mxu0 0.0
        %2014 = vmatprep.subr.mxu0 0.0
        %2015 = vmatpush1.msra.mxu0 0.0
        %2016 = vmatprep.subr.mxu0 0.0
        %2017 = vmatpush1.msra.mxu0 0.0
        %2018 = vmatprep.subr.mxu0 0.0
        %2019 = vmatpush1.msra.mxu0 0.0
        %2020 = vmatprep.subr.mxu0 0.0
        %2021 = vmatpush1.msra.mxu0 0.0
        %2022 = vmatprep.subr.mxu0 0.0
        %2023 = vmatpush1.msra.mxu0 0.0
        %2024 = vmatprep.subr.mxu0 0.0
        %2025 = vmatpush1.msra.mxu0 0.0
        %2026 = vmatprep.subr.mxu0 0.0
        %2027 = vmatpush1.msra.mxu0 0.0
        %2028 = vmatprep.subr.mxu0 0.0
        %2029 = vmatpush1.msra.mxu0 0.0
        %2030 = vmatprep.subr.mxu0 0.0
        %2031 = vmatpush1.msra.mxu0 0.0
        %2032 = vmatprep.subr.mxu0 0.0
        %2033 = vmatpush1.msra.mxu0 0.0
        %2034 = vmatprep.subr.mxu0 0.0
        %2035 = vmatpush1.msra.mxu0 0.0
        %2036 = vmatprep.subr.mxu0 0.0
        %2037 = vmatpush1.msra.mxu0 0.0
        %2038 = vmatprep.subr.mxu0 0.0
        %2039 = vmatpush1.msra.mxu0 0.0
        %2040 = vmatprep.subr.mxu0 0.0
        %2041 = vmatpush1.msra.mxu0 0.0
        %2042 = vmatprep.subr.mxu0 %v2007
        %2043 = vmatpush1.msra.mxu0 %v2006
        %2044 = vmatprep.subr.mxu0 0.0
        %2045 = vmatpush2.msra.mxu0 0.0
        %2046 = vmatprep.subr.mxu0 0.0
        %2047 = vmatpush2.msra.mxu0 0.0
        %2048 = vmatprep.subr.mxu0 0.0
        %2049 = vmatpush2.msra.mxu0 0.0
        %2050 = vmatprep.subr.mxu0 0.0
        %2051 = vmatpush2.msra.mxu0 0.0
        %2052 = vmatprep.subr.mxu0 0.0
        %2053 = vmatpush2.msra.mxu0 0.0
        %2054 = vmatprep.subr.mxu0 0.0
        %2055 = vmatpush2.msra.mxu0 0.0
        %2056 = vmatprep.subr.mxu0 0.0
        %2057 = vmatpush2.msra.mxu0 0.0
        %2058 = vmatprep.subr.mxu0 0.0
        %2059 = vmatpush2.msra.mxu0 0.0
        %2060 = vmatprep.subr.mxu0 0.0
        %2061 = vmatpush2.msra.mxu0 0.0
        %2062 = vmatprep.subr.mxu0 0.0
        %2063 = vmatpush2.msra.mxu0 0.0
        %2064 = vmatprep.subr.mxu0 0.0
        %2065 = vmatpush2.msra.mxu0 0.0
        %2066 = vmatprep.subr.mxu0 0.0
        %2067 = vmatpush2.msra.mxu0 0.0
        %2068 = vmatprep.subr.mxu0 0.0
        %2069 = vmatpush2.msra.mxu0 0.0
        %2070 = vmatprep.subr.mxu0 0.0
        %2071 = vmatpush2.msra.mxu0 0.0
        %2072 = vmatprep.subr.mxu0 0.0
        %2073 = vmatpush2.msra.mxu0 0.0
        %2074 = vmatprep.subr.mxu0 0.0
        %2075 = vmatpush2.msra.mxu0 0.0
        %2076 = vmatprep.mubr.f32.mxu0 0.0
        %2077 = vmatmul.mubr.f32.gmra.mxu0 %v2010
        %v2078 = vpop.f32.mrf.mxu0
        %v2079 = vadd.f32 0.0, %v2078
        %v2080 = vpop.f32.mrf.mxu0
        %v2081 = vadd.f32 0.0, %v2080
        %2082 = vdwg.mxu0
        %v2083 = vadd.f32 %v1982, %v2079
        %v2084 = vadd.f32 %v1983, %v2081
        %v2085 = vld [vmem:[%s4] sm:$0xff]
        %2087 = vset.pattern.permute.xlu0 0
        %2088 = vperm.xlu0 %2087, %v2085
        %v2089 = vpop.permute.xlu0 %2088
        %v2091 = vadd.f32 %v2083, %v2089
        %v2092 = vadd.f32 %v2084, %v2089
        %v2093 = vmax.f32 %v2091, 0.0
        %v2094 = vmax.f32 %v2092, 0.0
        %2095 = vst [vmem:[%s270] sm:$0xff] %v2093
        %2096 = vst [vmem:[%s270 + $0x8] sm:$0xff] %v2094
        %s2097 = sand.u32 %s161, 1
        %s2098 = scalar_lea.sflag [#allocation6], %s2097
        %s2099 = sand.u32 %s161, 1
        %s2100 = smul.addr %s2099, 16
        %s2101 = scalar_lea.vmem [#allocation9], %s2100
        // Predicated region
        $region53: #{tpu_custom_call.1} parent=43 // pred_check
          %p2102 = pneg %p171
        $region54: #{tpu_custom_call.1} parent=43 // pred_check_branch
          %2104 = sbr.rel (%p2102) target = $region56
        $region55: #{tpu_custom_call.1} parent=43 // pred_region
          %s2106 = ssub.s32 256, 256
          %2107 = vsyncadd %s2098, %s2106
          %s2108 = smul.addr %s22, 2
          %s2109 = smul.addr %s2108, 128
          %s2110 = scalar_lea.hbm %s6, %s2109
          %s2112 = sshll.u32 %s2101, 4
          %s2113 = int_to_ptr.vmem [resolvable:$true] %s2112
          %2115 = dma.vmem_to_hbm [thread:$0]  %s2113, 256, %s2110, %s2098
        $region56: #{tpu_custom_call.1} parent=43 // pred_fallthru
          _
      $region44: #{tpu_custom_call.1} parent=5 // pred_fallthru
        _
      %p2116 = scmp.le.s32.totalorder 2, %s17
      // Predicated region
      $region57: #{tpu_custom_call.1} parent=5 // pred_check
        %p2117 = pneg %p2116
      $region58: #{tpu_custom_call.1} parent=5 // pred_check_branch
        %2119 = sbr.rel (%p2117) target = $region60
      $region59: #{tpu_custom_call.1} parent=5 // pred_region
        %s2120 = ssub.s32 %s17, 2
        // Predicated region
        $region61: #{tpu_custom_call.1} parent=59 // pred_check
          %p2121 = pneg %p177
        $region62: #{tpu_custom_call.1} parent=59 // pred_check_branch
          %2123 = sbr.rel (%p2121) target = $region64
        $region63: #{tpu_custom_call.1} parent=59 // pred_region
          %s2124 = sand.u32 %s162, 1
          %s2125 = scalar_lea.sflag [#allocation6], %s2124
          %s2126 = sand.u32 %s162, 1
          %s2127 = smul.addr %s2126, 16
          %s2128 = scalar_lea.vmem [#allocation9], %s2127
          %2129 = dma.done %s2125, 256
        $region64: #{tpu_custom_call.1} parent=59 // pred_fallthru
          _
      $region60: #{tpu_custom_call.1} parent=5 // pred_fallthru
        _
    $region6: #{tpu_custom_call.1} parent=1 // loop_footer
      %s21 = sadd.s32 1, %s17
    $region7: #{tpu_custom_call.1} parent=1 // loop_footer_branch
      %16 = sbr.rel target = $region3
    $region8: #{tpu_custom_call.1} parent=1 // loop_exit
      _
    %2130 = vsyncpa [#allocation5], 1
    %s2131 = scalar_lea.sflag [#allocation5], 1
    %2132 = vsyncpa %s2131, 1
    %2133 = vsyncpa [#allocation8], 1
    %2134 = vsyncpa [#allocation6], 1
    %s2135 = scalar_lea.sflag [#allocation6], 1
    %2136 = vsyncpa %s2135, 1

</llo_original>
